<compile_context>
chip_gen: v7x
topology: tpu7x:2x2x1
jax: 0.10.0
libtpu: 0.0.40
codegen_flags: <defaults>
</compile_context>

<pallas_src>
import jax
import jax.numpy as jnp
from jax.experimental import pallas as pl
from jax.experimental.pallas import tpu as pltpu

BN_EPS = 1e-5


def _neck_kernel(x_ref, wbig_ref, fcb_ref, o_ref):
    # x_ref   : (TN, C*HW)   flattened NCHW activations (streamed, read exactly once)
    # wbig_ref: (C*HW, OUTp) depthwise weight * BN scale folded into the FC weight (resident)
    # fcb_ref : (1, OUTp)    dw bias + BN shift folded through the FC, plus fc bias (resident)
    # o_ref   : (TN, OUTp)
    out = jnp.dot(x_ref[...], wbig_ref[...], preferred_element_type=jnp.float32)
    o_ref[...] = (out + fcb_ref[...]).astype(o_ref.dtype)


def fold_params(params, eps=BN_EPS):
    """Constant-fold dw-conv bias + BatchNorm + FC into a single matmul. Call ONCE per model."""
    w_dw = params["w_dw"]                 # (C, HW)   torch (C,1,H,W) flattened
    fc_w = params["fc_w"]                 # (C, OUT)  torch (OUT, C) transposed
    fc_b = params["fc_b"]                 # (1, OUT)
    C, HW = w_dw.shape
    OUT = int(fc_w.shape[1])

    inv_std = jax.lax.rsqrt(params["bn_var"] + eps)                            # (1, C)
    scale = params["bn_gamma"] * inv_std                                       # (1, C)
    w_dw_s = w_dw * scale.reshape(C, 1)                                        # (C, HW)
    bias_c = scale * (params["b_dw"] - params["bn_mean"]) + params["bn_beta"]  # (1, C)
    fc_b_f = bias_c @ fc_w + fc_b                                              # (1, OUT)

    # Fold the depthwise reduce into the FC weight: (C, HW, OUT) -> (C*HW, OUT),
    # row index c*HW + hw matches flattened contiguous NCHW.
    w_big = (w_dw_s[:, :, None] * fc_w[:, None, :]).reshape(C * HW, OUT)

    # Pad OUT only up to the next multiple of 128 (lane-dense, unmasked output store).
    OUT_p = ((OUT + 127) // 128) * 128
    if OUT_p != OUT:
        w_big = jnp.pad(w_big, ((0, 0), (0, OUT_p - OUT)))
        fc_b_f = jnp.pad(fc_b_f, ((0, 0), (0, OUT_p - OUT)))

    return {"w_big": w_big, "fc_b": fc_b_f, "out": OUT}


def _vmem_limit_bytes():
    try:
        phys = pltpu.get_tpu_info().vmem_capacity_bytes
    except Exception:
        phys = 64 << 20  # conservative fallback (v7x per-TC VMEM)
    # ~0.625x physical: ~40 MiB on v7x (64 MiB/TC), capped at 80 MiB on v5e/v6e (128 MiB).
    return int(min(phys * 5 // 8, 80 << 20))


def _pick_tile_n(n, chw, out_p, vmem_limit_bytes):
    # Resident params (constant index_map) still get 2 pipeline buffers each.
    resident = 2 * 4 * (chw * out_p + 8 * out_p)           # W_big + (sublane-padded) bias
    budget = max(vmem_limit_bytes - resident - (4 << 20), 1)  # ~4 MiB compiler-scratch headroom
    per_row = 2 * 4 * (chw + out_p)                        # double-buffered x block + out block
    tn = budget // per_row
    # Keep >=2 grid steps (>=4 for larger batches) so v7x's two TCs both get work and the
    # BlockSpec pipeline can overlap the x DMA with the matmul.
    min_steps = 4 if n >= 32 else 2
    cap = max(8, ((-(-n // min_steps) + 7) // 8) * 8)
    tn = int(min(tn, 1024, cap, n))
    if tn < n:
        tn = max(8, (tn // 8) * 8)   # partial block dim must be 8-aligned
        if tn >= n:
            tn = n
    return max(1, tn)


def global_dw_neck_hybridL(x, kernel, x0, folded):
    """JAX wrapper mirroring GlobalDepthWiseNeck_hybridL.forward (inference, pre-folded params)."""
    N, C, H, W = x.shape
    CHW = C * H * W
    w_big = folded["w_big"]          # (C*HW, OUT_p)
    fc_b = folded["fc_b"]            # (1, OUT_p)
    OUT = folded["out"]
    assert w_big.shape[0] == CHW
    OUT_p = w_big.shape[1]

    # Free reshape of contiguous NCHW: x is read from HBM exactly once inside the kernel.
    x_flat = x.reshape(N, CHW)

    vmem_limit = _vmem_limit_bytes()
    TN = _pick_tile_n(N, CHW, OUT_p, vmem_limit)
    grid = (pl.cdiv(N, TN),)

    fc_out = pl.pallas_call(
        _neck_kernel,
        out_shape=jax.ShapeDtypeStruct((N, OUT_p), jnp.float32),
        grid_spec=pltpu.PrefetchScalarGridSpec(
            num_scalar_prefetch=0,
            grid=grid,
            in_specs=[
                pl.BlockSpec((TN, CHW), lambda i: (i, 0)),     # streamed over N
                pl.BlockSpec((CHW, OUT_p), lambda i: (0, 0)),  # resident folded weight
                pl.BlockSpec((1, OUT_p), lambda i: (0, 0)),    # resident folded bias
            ],
            out_specs=pl.BlockSpec((TN, OUT_p), lambda i: (i, 0)),
        ),
        compiler_params=pltpu.CompilerParams(
            dimension_semantics=("parallel",),   # batch grid sharded across v7x's 2 TCs
            vmem_limit_bytes=vmem_limit,
        ),
    )(x_flat, w_big, fc_b)

    if OUT_p != OUT:
        fc_out = fc_out[:, :OUT]
    return fc_out, kernel, x0
    # TODO(synk): optional bf16 cast of x / w_big for the DMA+MXU path (up to ~2x HBM bandwidth)
    # once downstream tolerance is confirmed; keep f32 accumulation via preferred_element_type.


def make_params(key, in_channels, out_channels, kernel_size):
    H, W = kernel_size
    ks = jax.random.split(key, 8)
    return {
        # depthwise conv: torch weight (C, 1, H, W) -> (C, H*W); bias (C,) -> (1, C)
        "w_dw": jax.random.normal(ks[0], (in_channels, H * W), jnp.float32) * 0.1,
        "b_dw": jax.random.normal(ks[1], (1, in_channels), jnp.float32) * 0.1,
        # BatchNorm2d (inference: running stats)
        "bn_gamma": jnp.ones((1, in_channels), jnp.float32)
                    + 0.05 * jax.random.normal(ks[2], (1, in_channels), jnp.float32),
        "bn_beta": 0.1 * jax.random.normal(ks[3], (1, in_channels), jnp.float32),
        "bn_mean": 0.1 * jax.random.normal(ks[4], (1, in_channels), jnp.float32),
        "bn_var": jnp.abs(jax.random.normal(ks[5], (1, in_channels), jnp.float32)) + 0.5,
        # fc: torch weight (OUT, C) -> stored transposed (C, OUT); bias (OUT,) -> (1, OUT)
        "fc_w": jax.random.normal(ks[6], (in_channels, out_channels), jnp.float32) * 0.1,
        "fc_b": jax.random.normal(ks[7], (1, out_channels), jnp.float32) * 0.1,
    }


def _reference(x, params):
    # Pure-JAX reference of the unfused math for correctness checking.
    N, C, H, W = x.shape
    xf = x.reshape(N, C, H * W)
    y = jnp.sum(xf * params["w_dw"][None], axis=-1) + params["b_dw"]
    y = params["bn_gamma"] * (y - params["bn_mean"]) \
        * jax.lax.rsqrt(params["bn_var"] + BN_EPS) + params["bn_beta"]
    return y @ params["fc_w"] + params["fc_b"]


if __name__ == "__main__":
    N = 16                     # enough rows for >=2 grid steps (pipeline + megacore sharding)
    in_channels = 64
    out_channels = 32
    kernel_size = (7, 6)       # depthwise kernel == spatial extent (HW = 42)

    key = jax.random.PRNGKey(0)
    kx, kk, k0, kp = jax.random.split(key, 4)

    x = jax.random.normal(kx, (N, in_channels, *kernel_size), jnp.float32)
    # Pass-through args of the original forward (arbitrary tensors).
    kernel_arg = jax.random.normal(kk, (N, 4, 4), jnp.float32)
    x0 = jax.random.normal(k0, (N, in_channels, 8, 8), jnp.float32)

    params = make_params(kp, in_channels, out_channels, kernel_size)
    folded = fold_params(params)   # constant folding done once, outside the hot path

    out, kernel_out, x0_out = global_dw_neck_hybridL(x, kernel_arg, x0, folded)
    out = jax.block_until_ready(out)

    ref = _reference(x, params)
    assert out.shape == (N, out_channels)
    assert jnp.allclose(out, ref, atol=2e-3, rtol=2e-3), "mismatch vs reference"
    assert kernel_out is kernel_arg and x0_out is x0

    print("KERNEL_OK")
</pallas_src>

<mosaic_0001>
module attributes {stable_mosaic.version = 11 : i64} {
  func.func @_neck_kernel(%arg0: i32, %arg1: memref<8x2688xf32, #tpu.memory_space<vmem>>, %arg2: memref<2688x128xf32, #tpu.memory_space<vmem>>, %arg3: memref<1x128xf32, #tpu.memory_space<vmem>>, %arg4: memref<8x128xf32, #tpu.memory_space<vmem>>) attributes {dimension_semantics = [#tpu.dimension_semantics<parallel>], iteration_bounds = array<i64: 2>, scalar_prefetch = 0 : i64, scratch_operands = 0 : i64, tpu.core_type = #tpu.core_type<tc>, window_params = [{transform_indices = @transform_0, window_bounds = array<i64: 8, 2688>}, {pipeline_mode = #tpu.pipeline_mode<synchronous>, transform_indices = @transform_1, window_bounds = array<i64: 2688, 128>}, {pipeline_mode = #tpu.pipeline_mode<synchronous>, transform_indices = @transform_2, window_bounds = array<i64: 1, 128>}, {transform_indices = @transform_3, window_bounds = array<i64: 8, 128>}]} {
    %c0 = arith.constant 0 : index
    %c0_0 = arith.constant 0 : index
    %0 = vector.load %arg1[%c0, %c0_0] : memref<8x2688xf32, #tpu.memory_space<vmem>>, vector<8x2688xf32>
    %c0_1 = arith.constant 0 : index
    %c0_2 = arith.constant 0 : index
    %1 = vector.load %arg2[%c0_1, %c0_2] : memref<2688x128xf32, #tpu.memory_space<vmem>>, vector<2688x128xf32>
    %cst = arith.constant dense<0.000000e+00> : vector<8x128xf32>
    %2 = tpu.matmul %0, %1, %cst {dimension_numbers = #tpu.dot_dimension_numbers<[1], [0], [0], [1], [0, 0, 1, 1], [], []>} : vector<8x2688xf32>, vector<2688x128xf32>, vector<8x128xf32> -> vector<8x128xf32>
    %c0_3 = arith.constant 0 : index
    %c0_4 = arith.constant 0 : index
    %3 = vector.load %arg3[%c0_3, %c0_4] : memref<1x128xf32, #tpu.memory_space<vmem>>, vector<1x128xf32>
    %4 = vector.broadcast %3 : vector<1x128xf32> to vector<8x128xf32>
    %5 = arith.addf %2, %4 : vector<8x128xf32>
    %c0_5 = arith.constant 0 : index
    %c0_6 = arith.constant 0 : index
    %6 = vector.load %arg4[%c0_5, %c0_6] : memref<8x128xf32, #tpu.memory_space<vmem>>, vector<8x128xf32>
    tpu.vector_store %arg4[%c0_5, %c0_6], %5 {strides = array<i32>} : memref<8x128xf32, #tpu.memory_space<vmem>>, vector<8x128xf32>,
    return
  }
  func.func @transform_0(%arg0: i32) -> (i32, i32) {
    %c0_i32 = arith.constant 0 : i32
    %c0_i32_0 = arith.constant 0 : i32
    return %arg0, %c0_i32 : i32, i32
  }
  func.func @transform_1(%arg0: i32) -> (i32, i32) {
    %c0_i32 = arith.constant 0 : i32
    %c0_i32_0 = arith.constant 0 : i32
    %c0_i32_1 = arith.constant 0 : i32
    return %c0_i32, %c0_i32_0 : i32, i32
  }
  func.func @transform_2(%arg0: i32) -> (i32, i32) {
    %c0_i32 = arith.constant 0 : i32
    %c0_i32_0 = arith.constant 0 : i32
    %c0_i32_1 = arith.constant 0 : i32
    return %c0_i32, %c0_i32_0 : i32, i32
  }
  func.func @transform_3(%arg0: i32) -> (i32, i32) {
    %c0_i32 = arith.constant 0 : i32
    %c0_i32_0 = arith.constant 0 : i32
    return %arg0, %c0_i32 : i32, i32
  }
}

</mosaic_0001>

<llo_original>
// kernel: tpu_custom_call.1
$region0: #{tpu_custom_call.1}
  #allocation0 [shape = 'u32[]', space=smem, size = 0x4, offset = 0x4, fixed_abs, tag = 'smem constant byte address 0x4 - core index']
  #allocation1 [shape = 'u32[144,128]{1,0:T(1,128)}', space=vmem, size = 0x12000, scoped, tag = 'internal scratch']
  %s0 = inlined_call_operand.hbm [shape: f32[16,2688], index: 0, kind: input, shape index: {}]
  %s1 = inlined_call_operand.hbm [shape: f32[2688,128], index: 1, kind: input, shape index: {}]
  %s2 = inlined_call_operand.hbm [shape: f32[1,128], index: 2, kind: input, shape index: {}]
  %s3 = inlined_call_operand.hbm [shape: f32[16,128], index: 3, kind: output, shape index: {}]
  %s4 = sld [smem:[#allocation0]]
  $region57: #{tpu_custom_call.1} parent=0
    _
  %s6 = ssub.s32 1, %s4
  %s7 = scalar_select 0, %s6, %s4
  $region1: #{tpu_custom_call.1} parent=0
    #allocation2 [shape = 'u8[172032]{0}', space=vmem, size = 0x2a000, scoped, tag = 'input window, operand 0']
    #allocation3 [shape = 's32[2]{0}', space=sflag, size = 0x8, scoped, tag = 'scoped memory for tpu_custom_call.1']
    #allocation4 [shape = 's32[2]{0}', space=sflag, size = 0x8, scoped, tag = 'scoped memory for tpu_custom_call.1']
    #allocation5 [shape = 'u8[1376256]{0}', space=vmem, size = 0x150000, scoped, tag = 'input window, operand 1, single buffered']
    #allocation6 [shape = 's32[1]{0}', space=sflag, size = 0x4, scoped, tag = 'scoped memory for tpu_custom_call.1']
    #allocation7 [shape = 'u8[512]{0}', space=vmem, size = 0x400, scoped, tag = 'input window, operand 2, single buffered']
    #allocation8 [shape = 'u8[8192]{0}', space=vmem, size = 0x2000, scoped, tag = 'output window, operand 0']
    %8 = vsyncpa [#allocation3], 0
    %s9 = scalar_lea.sflag [#allocation3], 1
    %10 = vsyncpa %s9, 0
    %11 = vsyncpa [#allocation6], 0
    %12 = vsyncpa [#allocation4], 0
    %s13 = scalar_lea.sflag [#allocation4], 1
    %14 = vsyncpa %s13, 0
    loop: start=0, step=1, limit=4
    $region2: #{tpu_custom_call.1} parent=1 // loop_pre_header
      _
    $region3: #{tpu_custom_call.1} parent=1 // loop_header
      %s16 = sphi 0, %s20
      %p17 = scmp.ge.s32.totalorder %s16, 4
      %s26 = sphi 0, %s28
      %s29 = sphi 0, %s26
      %s30 = sphi 0, %s29
      %s46 = sphi 0, %s30
      %s50 = sphi 0, %s50
      %s52 = sphi 0, %s50
      %s53 = sphi 0, %s52
      %s67 = sphi 0, %s53
      %s71 = sphi 0, %s71
      %s73 = sphi 0, %s71
      %s74 = sphi 0, %s73
      %s88 = sphi 0, %s74
      %s94 = sphi 0, %s96
      %s97 = sphi 0, %s94
      %s98 = sphi 0, %s97
      %s114 = sphi 0, %s98
    $region4: #{tpu_custom_call.1} parent=1 // loop_header_branch
      %19 = sbr.rel (%p17) target = $region8
    $region5: #{tpu_custom_call.1} parent=1 // loop_body
      %s21 = ssub.s32 %s16, 1
      %s22 = ssub.s32 %s16, 2
      %s23 = sadd.s32 %s16, 1
      %s24 = ssub.s32 %s16, %s23
      %p25 = scmp.eq.s32.totalorder %s24, 0
      %s27 = sadd.s32 %s26, 1
      %s28 = scalar_select %p25, %s26, %s27
      %p31 = pneg %p25
      %p32 = scmp.eq.s32.totalorder %s16, 1
      %p33 = por %p31, %p32
      %p34 = scmp.ne.s32.totalorder %s26, %s29
      %p35 = scmp.eq.s32.totalorder %s16, 0
      %p36 = por %p34, %p35
      %p37 = scmp.ne.s32.totalorder %s26, %s29
      %p38 = scmp.eq.s32.totalorder %s21, 1
      %p39 = por %p37, %p38
      %p40 = scmp.ne.s32.totalorder %s29, %s30
      %p41 = scmp.eq.s32.totalorder %s21, 0
      %p42 = por %p40, %p41
      %p43 = scmp.ne.s32.totalorder %s29, %s30
      %p44 = scmp.eq.s32.totalorder %s22, 1
      %p45 = por %p43, %p44
      %p47 = scmp.ne.s32.totalorder %s30, %s46
      %p48 = scmp.eq.s32.totalorder %s22, 0
      %p49 = por %p47, %p48
      %s51 = sadd.s32 %s50, 1
      %p54 = scmp.eq.s32.totalorder %s16, 1
      %p55 = scmp.ne.s32.totalorder %s50, %s52
      %p56 = scmp.eq.s32.totalorder %s16, 0
      %p57 = por %p55, %p56
      %p58 = scmp.ne.s32.totalorder %s50, %s52
      %p59 = scmp.eq.s32.totalorder %s21, 1
      %p60 = por %p58, %p59
      %p61 = scmp.ne.s32.totalorder %s52, %s53
      %p62 = scmp.eq.s32.totalorder %s21, 0
      %p63 = por %p61, %p62
      %p64 = scmp.ne.s32.totalorder %s52, %s53
      %p65 = scmp.eq.s32.totalorder %s22, 1
      %p66 = por %p64, %p65
      %p68 = scmp.ne.s32.totalorder %s53, %s67
      %p69 = scmp.eq.s32.totalorder %s22, 0
      %p70 = por %p68, %p69
      %s72 = sadd.s32 %s71, 1
      %p75 = scmp.eq.s32.totalorder %s16, 1
      %p76 = scmp.ne.s32.totalorder %s71, %s73
      %p77 = scmp.eq.s32.totalorder %s16, 0
      %p78 = por %p76, %p77
      %p79 = scmp.ne.s32.totalorder %s71, %s73
      %p80 = scmp.eq.s32.totalorder %s21, 1
      %p81 = por %p79, %p80
      %p82 = scmp.ne.s32.totalorder %s73, %s74
      %p83 = scmp.eq.s32.totalorder %s21, 0
      %p84 = por %p82, %p83
      %p85 = scmp.ne.s32.totalorder %s73, %s74
      %p86 = scmp.eq.s32.totalorder %s22, 1
      %p87 = por %p85, %p86
      %p89 = scmp.ne.s32.totalorder %s74, %s88
      %p90 = scmp.eq.s32.totalorder %s22, 0
      %p91 = por %p89, %p90
      %s92 = ssub.s32 %s16, %s23
      %p93 = scmp.eq.s32.totalorder %s92, 0
      %s95 = sadd.s32 %s94, 1
      %s96 = scalar_select %p93, %s94, %s95
      %p99 = pneg %p93
      %p100 = scmp.eq.s32.totalorder %s16, 1
      %p101 = por %p99, %p100
      %p102 = scmp.ne.s32.totalorder %s94, %s97
      %p103 = scmp.eq.s32.totalorder %s16, 0
      %p104 = por %p102, %p103
      %p105 = scmp.ne.s32.totalorder %s94, %s97
      %p106 = scmp.eq.s32.totalorder %s21, 1
      %p107 = por %p105, %p106
      %p108 = scmp.ne.s32.totalorder %s97, %s98
      %p109 = scmp.eq.s32.totalorder %s21, 0
      %p110 = por %p108, %p109
      %p111 = scmp.ne.s32.totalorder %s97, %s98
      %p112 = scmp.eq.s32.totalorder %s22, 1
      %p113 = por %p111, %p112
      %p115 = scmp.ne.s32.totalorder %s98, %s114
      %p116 = scmp.eq.s32.totalorder %s22, 0
      %p117 = por %p115, %p116
      %p118 = scmp.le.s32.totalorder 1, %s16
      %p119 = scmp.lt.s32.totalorder %s16, 3
      %p120 = pnand %p118, %p119
      %p121 = pneg %p120
      // Predicated region
      $region9: #{tpu_custom_call.1} parent=5 // pred_check
        _
      $region10: #{tpu_custom_call.1} parent=5 // pred_check_branch
        %123 = sbr.rel (%p120) target = $region12
      $region11: #{tpu_custom_call.1} parent=5 // pred_region
        %s124 = ssub.s32 %s16, 1
        // Predicated region
        $region13: #{tpu_custom_call.1} parent=11 // pred_check
          %p125 = pneg %p63
        $region14: #{tpu_custom_call.1} parent=11 // pred_check_branch
          %127 = sbr.rel (%p125) target = $region16
        $region15: #{tpu_custom_call.1} parent=11 // pred_region
          %s129 = ssub.s32 43008, 43008
          %130 = vsyncadd [#allocation6], %s129
          %s131 = sshll.u32 [#allocation5], 4
          %s132 = int_to_ptr.vmem [resolvable:$true] %s131
          %137 = dma.hbm_to_vmem [thread:$0]  %s1, 43008, %s132, [#allocation6], 128, 128, 8
        $region16: #{tpu_custom_call.1} parent=11 // pred_fallthru
          _
        // Predicated region
        $region17: #{tpu_custom_call.1} parent=11 // pred_check
          %p138 = pneg %p84
        $region18: #{tpu_custom_call.1} parent=11 // pred_check_branch
          %140 = sbr.rel (%p138) target = $region20
        $region19: #{tpu_custom_call.1} parent=11 // pred_region
          %s142 = ssub.s32 16, 16
          %143 = vsyncadd [#allocation6], %s142
          %s145 = sshll.u32 [#allocation7], 4
          %s146 = int_to_ptr.vmem [resolvable:$true] %s145
          %148 = dma.hbm_to_vmem [thread:$0]  %s2, 16, %s146, [#allocation6]
        $region20: #{tpu_custom_call.1} parent=11 // pred_fallthru
          _
      $region12: #{tpu_custom_call.1} parent=5 // pred_fallthru
        _
      %p149 = scmp.lt.s32.totalorder %s16, 2
      // Predicated region
      $region21: #{tpu_custom_call.1} parent=5 // pred_check
        %p150 = pneg %p149
      $region22: #{tpu_custom_call.1} parent=5 // pred_check_branch
        %152 = sbr.rel (%p150) target = $region24
      $region23: #{tpu_custom_call.1} parent=5 // pred_region
        // Predicated region
        $region25: #{tpu_custom_call.1} parent=23 // pred_check
          %p153 = pneg %p36
        $region26: #{tpu_custom_call.1} parent=23 // pred_check_branch
          %155 = sbr.rel (%p153) target = $region28
        $region27: #{tpu_custom_call.1} parent=23 // pred_region
          %s156 = sand.u32 %s26, 1
          %s157 = scalar_lea.sflag [#allocation3], %s156
          %s158 = sand.u32 %s26, 1
          %s159 = smul.addr %s158, 168
          %s160 = scalar_lea.vmem [#allocation2], %s159
          %s162 = ssub.s32 2688, 2688
          %163 = vsyncadd %s157, %s162
          %s164 = smul.addr %s16, 21
          %s165 = smul.addr %s164, 128
          %s166 = scalar_lea.hbm %s0, %s165
          %s168 = sshll.u32 %s160, 4
          %s169 = int_to_ptr.vmem [resolvable:$true] %s168
          %171 = dma.hbm_to_vmem [thread:$0]  %s166, 2688, %s169, %s157
        $region28: #{tpu_custom_call.1} parent=23 // pred_fallthru
          _
      $region24: #{tpu_custom_call.1} parent=5 // pred_fallthru
        _
      %p172 = scmp.le.s32.totalorder 1, %s16
      %p173 = scmp.lt.s32.totalorder %s16, 3
      %p174 = pnand %p172, %p173
      %p175 = pneg %p174
      // Predicated region
      $region29: #{tpu_custom_call.1} parent=5 // pred_check
        _
      $region30: #{tpu_custom_call.1} parent=5 // pred_check_branch
        %177 = sbr.rel (%p174) target = $region32
      $region31: #{tpu_custom_call.1} parent=5 // pred_region
        %s178 = ssub.s32 %s16, 1
        %s179 = sand.u32 %s29, 1
        %s180 = scalar_lea.sflag [#allocation3], %s179
        %s181 = sand.u32 %s29, 1
        %s182 = smul.addr %s181, 168
        %s183 = scalar_lea.vmem [#allocation2], %s182
        // Predicated region
        $region33: #{tpu_custom_call.1} parent=31 // pred_check
          %p184 = pneg %p42
        $region34: #{tpu_custom_call.1} parent=31 // pred_check_branch
          %186 = sbr.rel (%p184) target = $region36
        $region35: #{tpu_custom_call.1} parent=31 // pred_region
          %187 = dma.done %s180, 2688
        $region36: #{tpu_custom_call.1} parent=31 // pred_fallthru
          _
        // Predicated region
        $region37: #{tpu_custom_call.1} parent=31 // pred_check
          %p188 = pneg %p63
        $region38: #{tpu_custom_call.1} parent=31 // pred_check_branch
          %190 = sbr.rel (%p188) target = $region40
        $region39: #{tpu_custom_call.1} parent=31 // pred_region
          %191 = dma.done [#allocation6], 43008
        $region40: #{tpu_custom_call.1} parent=31 // pred_fallthru
          _
        // Predicated region
        $region41: #{tpu_custom_call.1} parent=31 // pred_check
          %p192 = pneg %p84
        $region42: #{tpu_custom_call.1} parent=31 // pred_check_branch
          %194 = sbr.rel (%p192) target = $region44
        $region43: #{tpu_custom_call.1} parent=31 // pred_region
          %195 = dma.done [#allocation6], 16
        $region44: #{tpu_custom_call.1} parent=31 // pred_fallthru
          _
        %s196 = sand.u32 %s29, 1
        %s197 = scalar_lea.sflag [#allocation3], %s196
        %s198 = sand.u32 %s29, 1
        %s199 = smul.addr %s198, 168
        %s200 = scalar_lea.vmem [#allocation2], %s199
        %p201 = pneg %p42
        %p202 = pneg %p39
        %p203 = pneg %p63
        %p204 = pneg %p60
        %p205 = pneg %p84
        %p206 = pneg %p81
        %p207 = pneg %p110
        %p208 = pneg %p107
        %s209 = sand.u32 %s97, 1
        %s210 = scalar_lea.sflag [#allocation4], %s209
        %s211 = sand.u32 %s97, 1
        %s212 = smul.addr %s211, 8
        %s213 = scalar_lea.vmem [#allocation8], %s212
        %v214 = vld [vmem:[%s183] sm:$0xff]
        %v215 = vld [vmem:[%s183 + $0x8] sm:$0xff]
        %v216 = vld [vmem:[%s183 + $0x10] sm:$0xff]
        %v217 = vld [vmem:[%s183 + $0x18] sm:$0xff]
        %v218 = vld [vmem:[%s183 + $0x20] sm:$0xff]
        %v219 = vld [vmem:[%s183 + $0x28] sm:$0xff]
        %v220 = vld [vmem:[%s183 + $0x30] sm:$0xff]
        %v221 = vld [vmem:[%s183 + $0x38] sm:$0xff]
        %v222 = vld [vmem:[%s183 + $0x40] sm:$0xff]
        %v223 = vld [vmem:[%s183 + $0x48] sm:$0xff]
        %v224 = vld [vmem:[%s183 + $0x50] sm:$0xff]
        %v225 = vld [vmem:[%s183 + $0x58] sm:$0xff]
        %v226 = vld [vmem:[%s183 + $0x60] sm:$0xff]
        %v227 = vld [vmem:[%s183 + $0x68] sm:$0xff]
        %v228 = vld [vmem:[%s183 + $0x70] sm:$0xff]
        %v229 = vld [vmem:[%s183 + $0x78] sm:$0xff]
        %v230 = vld [vmem:[%s183 + $0x80] sm:$0xff]
        %v231 = vld [vmem:[%s183 + $0x88] sm:$0xff]
        %v232 = vld [vmem:[%s183 + $0x90] sm:$0xff]
        %v233 = vld [vmem:[%s183 + $0x98] sm:$0xff]
        %v234 = vld [vmem:[%s183 + $0xa0] sm:$0xff]
        %v235 = vld [vmem:[#allocation5] sm:$0xff]
        %v236 = vld [vmem:[#allocation5 + $0x8] sm:$0xff]
        %v237 = vld [vmem:[#allocation5 + $0x10] sm:$0xff]
        %v238 = vld [vmem:[#allocation5 + $0x18] sm:$0xff]
        %v239 = vld [vmem:[#allocation5 + $0x20] sm:$0xff]
        %v240 = vld [vmem:[#allocation5 + $0x28] sm:$0xff]
        %v241 = vld [vmem:[#allocation5 + $0x30] sm:$0xff]
        %v242 = vld [vmem:[#allocation5 + $0x38] sm:$0xff]
        %v243 = vld [vmem:[#allocation5 + $0x40] sm:$0xff]
        %v244 = vld [vmem:[#allocation5 + $0x48] sm:$0xff]
        %v245 = vld [vmem:[#allocation5 + $0x50] sm:$0xff]
        %v246 = vld [vmem:[#allocation5 + $0x58] sm:$0xff]
        %v247 = vld [vmem:[#allocation5 + $0x60] sm:$0xff]
        %v248 = vld [vmem:[#allocation5 + $0x68] sm:$0xff]
        %v249 = vld [vmem:[#allocation5 + $0x70] sm:$0xff]
        %v250 = vld [vmem:[#allocation5 + $0x78] sm:$0xff]
        %v251 = vld [vmem:[#allocation5 + $0x80] sm:$0xff]
        %v252 = vld [vmem:[#allocation5 + $0x88] sm:$0xff]
        %v253 = vld [vmem:[#allocation5 + $0x90] sm:$0xff]
        %v254 = vld [vmem:[#allocation5 + $0x98] sm:$0xff]
        %v255 = vld [vmem:[#allocation5 + $0xa0] sm:$0xff]
        %v256 = vld [vmem:[#allocation5 + $0xa8] sm:$0xff]
        %v257 = vld [vmem:[#allocation5 + $0xb0] sm:$0xff]
        %v258 = vld [vmem:[#allocation5 + $0xb8] sm:$0xff]
        %v259 = vld [vmem:[#allocation5 + $0xc0] sm:$0xff]
        %v260 = vld [vmem:[#allocation5 + $0xc8] sm:$0xff]
        %v261 = vld [vmem:[#allocation5 + $0xd0] sm:$0xff]
        %v262 = vld [vmem:[#allocation5 + $0xd8] sm:$0xff]
        %v263 = vld [vmem:[#allocation5 + $0xe0] sm:$0xff]
        %v264 = vld [vmem:[#allocation5 + $0xe8] sm:$0xff]
        %v265 = vld [vmem:[#allocation5 + $0xf0] sm:$0xff]
        %v266 = vld [vmem:[#allocation5 + $0xf8] sm:$0xff]
        %v267 = vld [vmem:[#allocation5 + $0x100] sm:$0xff]
        %v268 = vld [vmem:[#allocation5 + $0x108] sm:$0xff]
        %v269 = vld [vmem:[#allocation5 + $0x110] sm:$0xff]
        %v270 = vld [vmem:[#allocation5 + $0x118] sm:$0xff]
        %v271 = vld [vmem:[#allocation5 + $0x120] sm:$0xff]
        %v272 = vld [vmem:[#allocation5 + $0x128] sm:$0xff]
        %v273 = vld [vmem:[#allocation5 + $0x130] sm:$0xff]
        %v274 = vld [vmem:[#allocation5 + $0x138] sm:$0xff]
        %v275 = vld [vmem:[#allocation5 + $0x140] sm:$0xff]
        %v276 = vld [vmem:[#allocation5 + $0x148] sm:$0xff]
        %v277 = vld [vmem:[#allocation5 + $0x150] sm:$0xff]
        %v278 = vld [vmem:[#allocation5 + $0x158] sm:$0xff]
        %v279 = vld [vmem:[#allocation5 + $0x160] sm:$0xff]
        %v280 = vld [vmem:[#allocation5 + $0x168] sm:$0xff]
        %v281 = vld [vmem:[#allocation5 + $0x170] sm:$0xff]
        %v282 = vld [vmem:[#allocation5 + $0x178] sm:$0xff]
        %v283 = vld [vmem:[#allocation5 + $0x180] sm:$0xff]
        %v284 = vld [vmem:[#allocation5 + $0x188] sm:$0xff]
        %v285 = vld [vmem:[#allocation5 + $0x190] sm:$0xff]
        %v286 = vld [vmem:[#allocation5 + $0x198] sm:$0xff]
        %v287 = vld [vmem:[#allocation5 + $0x1a0] sm:$0xff]
        %v288 = vld [vmem:[#allocation5 + $0x1a8] sm:$0xff]
        %v289 = vld [vmem:[#allocation5 + $0x1b0] sm:$0xff]
        %v290 = vld [vmem:[#allocation5 + $0x1b8] sm:$0xff]
        %v291 = vld [vmem:[#allocation5 + $0x1c0] sm:$0xff]
        %v292 = vld [vmem:[#allocation5 + $0x1c8] sm:$0xff]
        %v293 = vld [vmem:[#allocation5 + $0x1d0] sm:$0xff]
        %v294 = vld [vmem:[#allocation5 + $0x1d8] sm:$0xff]
        %v295 = vld [vmem:[#allocation5 + $0x1e0] sm:$0xff]
        %v296 = vld [vmem:[#allocation5 + $0x1e8] sm:$0xff]
        %v297 = vld [vmem:[#allocation5 + $0x1f0] sm:$0xff]
        %v298 = vld [vmem:[#allocation5 + $0x1f8] sm:$0xff]
        %v299 = vld [vmem:[#allocation5 + $0x200] sm:$0xff]
        %v300 = vld [vmem:[#allocation5 + $0x208] sm:$0xff]
        %v301 = vld [vmem:[#allocation5 + $0x210] sm:$0xff]
        %v302 = vld [vmem:[#allocation5 + $0x218] sm:$0xff]
        %v303 = vld [vmem:[#allocation5 + $0x220] sm:$0xff]
        %v304 = vld [vmem:[#allocation5 + $0x228] sm:$0xff]
        %v305 = vld [vmem:[#allocation5 + $0x230] sm:$0xff]
        %v306 = vld [vmem:[#allocation5 + $0x238] sm:$0xff]
        %v307 = vld [vmem:[#allocation5 + $0x240] sm:$0xff]
        %v308 = vld [vmem:[#allocation5 + $0x248] sm:$0xff]
        %v309 = vld [vmem:[#allocation5 + $0x250] sm:$0xff]
        %v310 = vld [vmem:[#allocation5 + $0x258] sm:$0xff]
        %v311 = vld [vmem:[#allocation5 + $0x260] sm:$0xff]
        %v312 = vld [vmem:[#allocation5 + $0x268] sm:$0xff]
        %v313 = vld [vmem:[#allocation5 + $0x270] sm:$0xff]
        %v314 = vld [vmem:[#allocation5 + $0x278] sm:$0xff]
        %v315 = vld [vmem:[#allocation5 + $0x280] sm:$0xff]
        %v316 = vld [vmem:[#allocation5 + $0x288] sm:$0xff]
        %v317 = vld [vmem:[#allocation5 + $0x290] sm:$0xff]
        %v318 = vld [vmem:[#allocation5 + $0x298] sm:$0xff]
        %v319 = vld [vmem:[#allocation5 + $0x2a0] sm:$0xff]
        %v320 = vld [vmem:[#allocation5 + $0x2a8] sm:$0xff]
        %v321 = vld [vmem:[#allocation5 + $0x2b0] sm:$0xff]
        %v322 = vld [vmem:[#allocation5 + $0x2b8] sm:$0xff]
        %v323 = vld [vmem:[#allocation5 + $0x2c0] sm:$0xff]
        %v324 = vld [vmem:[#allocation5 + $0x2c8] sm:$0xff]
        %v325 = vld [vmem:[#allocation5 + $0x2d0] sm:$0xff]
        %v326 = vld [vmem:[#allocation5 + $0x2d8] sm:$0xff]
        %v327 = vld [vmem:[#allocation5 + $0x2e0] sm:$0xff]
        %v328 = vld [vmem:[#allocation5 + $0x2e8] sm:$0xff]
        %v329 = vld [vmem:[#allocation5 + $0x2f0] sm:$0xff]
        %v330 = vld [vmem:[#allocation5 + $0x2f8] sm:$0xff]
        %v331 = vld [vmem:[#allocation5 + $0x300] sm:$0xff]
        %v332 = vld [vmem:[#allocation5 + $0x308] sm:$0xff]
        %v333 = vld [vmem:[#allocation5 + $0x310] sm:$0xff]
        %v334 = vld [vmem:[#allocation5 + $0x318] sm:$0xff]
        %v335 = vld [vmem:[#allocation5 + $0x320] sm:$0xff]
        %v336 = vld [vmem:[#allocation5 + $0x328] sm:$0xff]
        %v337 = vld [vmem:[#allocation5 + $0x330] sm:$0xff]
        %v338 = vld [vmem:[#allocation5 + $0x338] sm:$0xff]
        %v339 = vld [vmem:[#allocation5 + $0x340] sm:$0xff]
        %v340 = vld [vmem:[#allocation5 + $0x348] sm:$0xff]
        %v341 = vld [vmem:[#allocation5 + $0x350] sm:$0xff]
        %v342 = vld [vmem:[#allocation5 + $0x358] sm:$0xff]
        %v343 = vld [vmem:[#allocation5 + $0x360] sm:$0xff]
        %v344 = vld [vmem:[#allocation5 + $0x368] sm:$0xff]
        %v345 = vld [vmem:[#allocation5 + $0x370] sm:$0xff]
        %v346 = vld [vmem:[#allocation5 + $0x378] sm:$0xff]
        %v347 = vld [vmem:[#allocation5 + $0x380] sm:$0xff]
        %v348 = vld [vmem:[#allocation5 + $0x388] sm:$0xff]
        %v349 = vld [vmem:[#allocation5 + $0x390] sm:$0xff]
        %v350 = vld [vmem:[#allocation5 + $0x398] sm:$0xff]
        %v351 = vld [vmem:[#allocation5 + $0x3a0] sm:$0xff]
        %v352 = vld [vmem:[#allocation5 + $0x3a8] sm:$0xff]
        %v353 = vld [vmem:[#allocation5 + $0x3b0] sm:$0xff]
        %v354 = vld [vmem:[#allocation5 + $0x3b8] sm:$0xff]
        %v355 = vld [vmem:[#allocation5 + $0x3c0] sm:$0xff]
        %v356 = vld [vmem:[#allocation5 + $0x3c8] sm:$0xff]
        %v357 = vld [vmem:[#allocation5 + $0x3d0] sm:$0xff]
        %v358 = vld [vmem:[#allocation5 + $0x3d8] sm:$0xff]
        %v359 = vld [vmem:[#allocation5 + $0x3e0] sm:$0xff]
        %v360 = vld [vmem:[#allocation5 + $0x3e8] sm:$0xff]
        %v361 = vld [vmem:[#allocation5 + $0x3f0] sm:$0xff]
        %v362 = vld [vmem:[#allocation5 + $0x3f8] sm:$0xff]
        %v363 = vld [vmem:[#allocation5 + $0x400] sm:$0xff]
        %v364 = vld [vmem:[#allocation5 + $0x408] sm:$0xff]
        %v365 = vld [vmem:[#allocation5 + $0x410] sm:$0xff]
        %v366 = vld [vmem:[#allocation5 + $0x418] sm:$0xff]
        %v367 = vld [vmem:[#allocation5 + $0x420] sm:$0xff]
        %v368 = vld [vmem:[#allocation5 + $0x428] sm:$0xff]
        %v369 = vld [vmem:[#allocation5 + $0x430] sm:$0xff]
        %v370 = vld [vmem:[#allocation5 + $0x438] sm:$0xff]
        %v371 = vld [vmem:[#allocation5 + $0x440] sm:$0xff]
        %v372 = vld [vmem:[#allocation5 + $0x448] sm:$0xff]
        %v373 = vld [vmem:[#allocation5 + $0x450] sm:$0xff]
        %v374 = vld [vmem:[#allocation5 + $0x458] sm:$0xff]
        %v375 = vld [vmem:[#allocation5 + $0x460] sm:$0xff]
        %v376 = vld [vmem:[#allocation5 + $0x468] sm:$0xff]
        %v377 = vld [vmem:[#allocation5 + $0x470] sm:$0xff]
        %v378 = vld [vmem:[#allocation5 + $0x478] sm:$0xff]
        %v379 = vld [vmem:[#allocation5 + $0x480] sm:$0xff]
        %v380 = vld [vmem:[#allocation5 + $0x488] sm:$0xff]
        %v381 = vld [vmem:[#allocation5 + $0x490] sm:$0xff]
        %v382 = vld [vmem:[#allocation5 + $0x498] sm:$0xff]
        %v383 = vld [vmem:[#allocation5 + $0x4a0] sm:$0xff]
        %v384 = vld [vmem:[#allocation5 + $0x4a8] sm:$0xff]
        %v385 = vld [vmem:[#allocation5 + $0x4b0] sm:$0xff]
        %v386 = vld [vmem:[#allocation5 + $0x4b8] sm:$0xff]
        %v387 = vld [vmem:[#allocation5 + $0x4c0] sm:$0xff]
        %v388 = vld [vmem:[#allocation5 + $0x4c8] sm:$0xff]
        %v389 = vld [vmem:[#allocation5 + $0x4d0] sm:$0xff]
        %v390 = vld [vmem:[#allocation5 + $0x4d8] sm:$0xff]
        %v391 = vld [vmem:[#allocation5 + $0x4e0] sm:$0xff]
        %v392 = vld [vmem:[#allocation5 + $0x4e8] sm:$0xff]
        %v393 = vld [vmem:[#allocation5 + $0x4f0] sm:$0xff]
        %v394 = vld [vmem:[#allocation5 + $0x4f8] sm:$0xff]
        %v395 = vld [vmem:[#allocation5 + $0x500] sm:$0xff]
        %v396 = vld [vmem:[#allocation5 + $0x508] sm:$0xff]
        %v397 = vld [vmem:[#allocation5 + $0x510] sm:$0xff]
        %v398 = vld [vmem:[#allocation5 + $0x518] sm:$0xff]
        %v399 = vld [vmem:[#allocation5 + $0x520] sm:$0xff]
        %v400 = vld [vmem:[#allocation5 + $0x528] sm:$0xff]
        %v401 = vld [vmem:[#allocation5 + $0x530] sm:$0xff]
        %v402 = vld [vmem:[#allocation5 + $0x538] sm:$0xff]
        %v403 = vld [vmem:[#allocation5 + $0x540] sm:$0xff]
        %v404 = vld [vmem:[#allocation5 + $0x548] sm:$0xff]
        %v405 = vld [vmem:[#allocation5 + $0x550] sm:$0xff]
        %v406 = vld [vmem:[#allocation5 + $0x558] sm:$0xff]
        %v407 = vld [vmem:[#allocation5 + $0x560] sm:$0xff]
        %v408 = vld [vmem:[#allocation5 + $0x568] sm:$0xff]
        %v409 = vld [vmem:[#allocation5 + $0x570] sm:$0xff]
        %v410 = vld [vmem:[#allocation5 + $0x578] sm:$0xff]
        %v411 = vld [vmem:[#allocation5 + $0x580] sm:$0xff]
        %v412 = vld [vmem:[#allocation5 + $0x588] sm:$0xff]
        %v413 = vld [vmem:[#allocation5 + $0x590] sm:$0xff]
        %v414 = vld [vmem:[#allocation5 + $0x598] sm:$0xff]
        %v415 = vld [vmem:[#allocation5 + $0x5a0] sm:$0xff]
        %v416 = vld [vmem:[#allocation5 + $0x5a8] sm:$0xff]
        %v417 = vld [vmem:[#allocation5 + $0x5b0] sm:$0xff]
        %v418 = vld [vmem:[#allocation5 + $0x5b8] sm:$0xff]
        %v419 = vld [vmem:[#allocation5 + $0x5c0] sm:$0xff]
        %v420 = vld [vmem:[#allocation5 + $0x5c8] sm:$0xff]
        %v421 = vld [vmem:[#allocation5 + $0x5d0] sm:$0xff]
        %v422 = vld [vmem:[#allocation5 + $0x5d8] sm:$0xff]
        %v423 = vld [vmem:[#allocation5 + $0x5e0] sm:$0xff]
        %v424 = vld [vmem:[#allocation5 + $0x5e8] sm:$0xff]
        %v425 = vld [vmem:[#allocation5 + $0x5f0] sm:$0xff]
        %v426 = vld [vmem:[#allocation5 + $0x5f8] sm:$0xff]
        %v427 = vld [vmem:[#allocation5 + $0x600] sm:$0xff]
        %v428 = vld [vmem:[#allocation5 + $0x608] sm:$0xff]
        %v429 = vld [vmem:[#allocation5 + $0x610] sm:$0xff]
        %v430 = vld [vmem:[#allocation5 + $0x618] sm:$0xff]
        %v431 = vld [vmem:[#allocation5 + $0x620] sm:$0xff]
        %v432 = vld [vmem:[#allocation5 + $0x628] sm:$0xff]
        %v433 = vld [vmem:[#allocation5 + $0x630] sm:$0xff]
        %v434 = vld [vmem:[#allocation5 + $0x638] sm:$0xff]
        %v435 = vld [vmem:[#allocation5 + $0x640] sm:$0xff]
        %v436 = vld [vmem:[#allocation5 + $0x648] sm:$0xff]
        %v437 = vld [vmem:[#allocation5 + $0x650] sm:$0xff]
        %v438 = vld [vmem:[#allocation5 + $0x658] sm:$0xff]
        %v439 = vld [vmem:[#allocation5 + $0x660] sm:$0xff]
        %v440 = vld [vmem:[#allocation5 + $0x668] sm:$0xff]
        %v441 = vld [vmem:[#allocation5 + $0x670] sm:$0xff]
        %v442 = vld [vmem:[#allocation5 + $0x678] sm:$0xff]
        %v443 = vld [vmem:[#allocation5 + $0x680] sm:$0xff]
        %v444 = vld [vmem:[#allocation5 + $0x688] sm:$0xff]
        %v445 = vld [vmem:[#allocation5 + $0x690] sm:$0xff]
        %v446 = vld [vmem:[#allocation5 + $0x698] sm:$0xff]
        %v447 = vld [vmem:[#allocation5 + $0x6a0] sm:$0xff]
        %v448 = vld [vmem:[#allocation5 + $0x6a8] sm:$0xff]
        %v449 = vld [vmem:[#allocation5 + $0x6b0] sm:$0xff]
        %v450 = vld [vmem:[#allocation5 + $0x6b8] sm:$0xff]
        %v451 = vld [vmem:[#allocation5 + $0x6c0] sm:$0xff]
        %v452 = vld [vmem:[#allocation5 + $0x6c8] sm:$0xff]
        %v453 = vld [vmem:[#allocation5 + $0x6d0] sm:$0xff]
        %v454 = vld [vmem:[#allocation5 + $0x6d8] sm:$0xff]
        %v455 = vld [vmem:[#allocation5 + $0x6e0] sm:$0xff]
        %v456 = vld [vmem:[#allocation5 + $0x6e8] sm:$0xff]
        %v457 = vld [vmem:[#allocation5 + $0x6f0] sm:$0xff]
        %v458 = vld [vmem:[#allocation5 + $0x6f8] sm:$0xff]
        %v459 = vld [vmem:[#allocation5 + $0x700] sm:$0xff]
        %v460 = vld [vmem:[#allocation5 + $0x708] sm:$0xff]
        %v461 = vld [vmem:[#allocation5 + $0x710] sm:$0xff]
        %v462 = vld [vmem:[#allocation5 + $0x718] sm:$0xff]
        %v463 = vld [vmem:[#allocation5 + $0x720] sm:$0xff]
        %v464 = vld [vmem:[#allocation5 + $0x728] sm:$0xff]
        %v465 = vld [vmem:[#allocation5 + $0x730] sm:$0xff]
        %v466 = vld [vmem:[#allocation5 + $0x738] sm:$0xff]
        %v467 = vld [vmem:[#allocation5 + $0x740] sm:$0xff]
        %v468 = vld [vmem:[#allocation5 + $0x748] sm:$0xff]
        %v469 = vld [vmem:[#allocation5 + $0x750] sm:$0xff]
        %v470 = vld [vmem:[#allocation5 + $0x758] sm:$0xff]
        %v471 = vld [vmem:[#allocation5 + $0x760] sm:$0xff]
        %v472 = vld [vmem:[#allocation5 + $0x768] sm:$0xff]
        %v473 = vld [vmem:[#allocation5 + $0x770] sm:$0xff]
        %v474 = vld [vmem:[#allocation5 + $0x778] sm:$0xff]
        %v475 = vld [vmem:[#allocation5 + $0x780] sm:$0xff]
        %v476 = vld [vmem:[#allocation5 + $0x788] sm:$0xff]
        %v477 = vld [vmem:[#allocation5 + $0x790] sm:$0xff]
        %v478 = vld [vmem:[#allocation5 + $0x798] sm:$0xff]
        %v479 = vld [vmem:[#allocation5 + $0x7a0] sm:$0xff]
        %v480 = vld [vmem:[#allocation5 + $0x7a8] sm:$0xff]
        %v481 = vld [vmem:[#allocation5 + $0x7b0] sm:$0xff]
        %v482 = vld [vmem:[#allocation5 + $0x7b8] sm:$0xff]
        %v483 = vld [vmem:[#allocation5 + $0x7c0] sm:$0xff]
        %v484 = vld [vmem:[#allocation5 + $0x7c8] sm:$0xff]
        %v485 = vld [vmem:[#allocation5 + $0x7d0] sm:$0xff]
        %v486 = vld [vmem:[#allocation5 + $0x7d8] sm:$0xff]
        %v487 = vld [vmem:[#allocation5 + $0x7e0] sm:$0xff]
        %v488 = vld [vmem:[#allocation5 + $0x7e8] sm:$0xff]
        %v489 = vld [vmem:[#allocation5 + $0x7f0] sm:$0xff]
        %v490 = vld [vmem:[#allocation5 + $0x7f8] sm:$0xff]
        %v491 = vld [vmem:[#allocation5 + $0x800] sm:$0xff]
        %v492 = vld [vmem:[#allocation5 + $0x808] sm:$0xff]
        %v493 = vld [vmem:[#allocation5 + $0x810] sm:$0xff]
        %v494 = vld [vmem:[#allocation5 + $0x818] sm:$0xff]
        %v495 = vld [vmem:[#allocation5 + $0x820] sm:$0xff]
        %v496 = vld [vmem:[#allocation5 + $0x828] sm:$0xff]
        %v497 = vld [vmem:[#allocation5 + $0x830] sm:$0xff]
        %v498 = vld [vmem:[#allocation5 + $0x838] sm:$0xff]
        %v499 = vld [vmem:[#allocation5 + $0x840] sm:$0xff]
        %v500 = vld [vmem:[#allocation5 + $0x848] sm:$0xff]
        %v501 = vld [vmem:[#allocation5 + $0x850] sm:$0xff]
        %v502 = vld [vmem:[#allocation5 + $0x858] sm:$0xff]
        %v503 = vld [vmem:[#allocation5 + $0x860] sm:$0xff]
        %v504 = vld [vmem:[#allocation5 + $0x868] sm:$0xff]
        %v505 = vld [vmem:[#allocation5 + $0x870] sm:$0xff]
        %v506 = vld [vmem:[#allocation5 + $0x878] sm:$0xff]
        %v507 = vld [vmem:[#allocation5 + $0x880] sm:$0xff]
        %v508 = vld [vmem:[#allocation5 + $0x888] sm:$0xff]
        %v509 = vld [vmem:[#allocation5 + $0x890] sm:$0xff]
        %v510 = vld [vmem:[#allocation5 + $0x898] sm:$0xff]
        %v511 = vld [vmem:[#allocation5 + $0x8a0] sm:$0xff]
        %v512 = vld [vmem:[#allocation5 + $0x8a8] sm:$0xff]
        %v513 = vld [vmem:[#allocation5 + $0x8b0] sm:$0xff]
        %v514 = vld [vmem:[#allocation5 + $0x8b8] sm:$0xff]
        %v515 = vld [vmem:[#allocation5 + $0x8c0] sm:$0xff]
        %v516 = vld [vmem:[#allocation5 + $0x8c8] sm:$0xff]
        %v517 = vld [vmem:[#allocation5 + $0x8d0] sm:$0xff]
        %v518 = vld [vmem:[#allocation5 + $0x8d8] sm:$0xff]
        %v519 = vld [vmem:[#allocation5 + $0x8e0] sm:$0xff]
        %v520 = vld [vmem:[#allocation5 + $0x8e8] sm:$0xff]
        %v521 = vld [vmem:[#allocation5 + $0x8f0] sm:$0xff]
        %v522 = vld [vmem:[#allocation5 + $0x8f8] sm:$0xff]
        %v523 = vld [vmem:[#allocation5 + $0x900] sm:$0xff]
        %v524 = vld [vmem:[#allocation5 + $0x908] sm:$0xff]
        %v525 = vld [vmem:[#allocation5 + $0x910] sm:$0xff]
        %v526 = vld [vmem:[#allocation5 + $0x918] sm:$0xff]
        %v527 = vld [vmem:[#allocation5 + $0x920] sm:$0xff]
        %v528 = vld [vmem:[#allocation5 + $0x928] sm:$0xff]
        %v529 = vld [vmem:[#allocation5 + $0x930] sm:$0xff]
        %v530 = vld [vmem:[#allocation5 + $0x938] sm:$0xff]
        %v531 = vld [vmem:[#allocation5 + $0x940] sm:$0xff]
        %v532 = vld [vmem:[#allocation5 + $0x948] sm:$0xff]
        %v533 = vld [vmem:[#allocation5 + $0x950] sm:$0xff]
        %v534 = vld [vmem:[#allocation5 + $0x958] sm:$0xff]
        %v535 = vld [vmem:[#allocation5 + $0x960] sm:$0xff]
        %v536 = vld [vmem:[#allocation5 + $0x968] sm:$0xff]
        %v537 = vld [vmem:[#allocation5 + $0x970] sm:$0xff]
        %v538 = vld [vmem:[#allocation5 + $0x978] sm:$0xff]
        %v539 = vld [vmem:[#allocation5 + $0x980] sm:$0xff]
        %v540 = vld [vmem:[#allocation5 + $0x988] sm:$0xff]
        %v541 = vld [vmem:[#allocation5 + $0x990] sm:$0xff]
        %v542 = vld [vmem:[#allocation5 + $0x998] sm:$0xff]
        %v543 = vld [vmem:[#allocation5 + $0x9a0] sm:$0xff]
        %v544 = vld [vmem:[#allocation5 + $0x9a8] sm:$0xff]
        %v545 = vld [vmem:[#allocation5 + $0x9b0] sm:$0xff]
        %v546 = vld [vmem:[#allocation5 + $0x9b8] sm:$0xff]
        %v547 = vld [vmem:[#allocation5 + $0x9c0] sm:$0xff]
        %v548 = vld [vmem:[#allocation5 + $0x9c8] sm:$0xff]
        %v549 = vld [vmem:[#allocation5 + $0x9d0] sm:$0xff]
        %v550 = vld [vmem:[#allocation5 + $0x9d8] sm:$0xff]
        %v551 = vld [vmem:[#allocation5 + $0x9e0] sm:$0xff]
        %v552 = vld [vmem:[#allocation5 + $0x9e8] sm:$0xff]
        %v553 = vld [vmem:[#allocation5 + $0x9f0] sm:$0xff]
        %v554 = vld [vmem:[#allocation5 + $0x9f8] sm:$0xff]
        %v555 = vld [vmem:[#allocation5 + $0xa00] sm:$0xff]
        %v556 = vld [vmem:[#allocation5 + $0xa08] sm:$0xff]
        %v557 = vld [vmem:[#allocation5 + $0xa10] sm:$0xff]
        %v558 = vld [vmem:[#allocation5 + $0xa18] sm:$0xff]
        %v559 = vld [vmem:[#allocation5 + $0xa20] sm:$0xff]
        %v560 = vld [vmem:[#allocation5 + $0xa28] sm:$0xff]
        %v561 = vld [vmem:[#allocation5 + $0xa30] sm:$0xff]
        %v562 = vld [vmem:[#allocation5 + $0xa38] sm:$0xff]
        %v563 = vld [vmem:[#allocation5 + $0xa40] sm:$0xff]
        %v564 = vld [vmem:[#allocation5 + $0xa48] sm:$0xff]
        %v565 = vld [vmem:[#allocation5 + $0xa50] sm:$0xff]
        %v566 = vld [vmem:[#allocation5 + $0xa58] sm:$0xff]
        %v567 = vld [vmem:[#allocation5 + $0xa60] sm:$0xff]
        %v568 = vld [vmem:[#allocation5 + $0xa68] sm:$0xff]
        %v569 = vld [vmem:[#allocation5 + $0xa70] sm:$0xff]
        %v570 = vld [vmem:[#allocation5 + $0xa78] sm:$0xff]
        %v571 = vld [vmem:[#allocation7] sm:$0x1]
        %v573 = vlaneseq
        %v574 = vshrl.u32 %v573, 7
        %v575 = vsub.s32 0, %v574
        %v576 = vrot.slane %v571, %v575
        %578 = vmatprep.subr.mxu0 0.0
        %579 = vmatpush1.msra.mxu0 %v235
        %580 = vmatprep.subr.mxu0 0.0
        %581 = vmatpush1.msra.mxu0 %v236
        %582 = vmatprep.subr.mxu0 0.0
        %583 = vmatpush1.msra.mxu0 %v237
        %584 = vmatprep.subr.mxu0 0.0
        %585 = vmatpush1.msra.mxu0 %v238
        %586 = vmatprep.subr.mxu0 0.0
        %587 = vmatpush1.msra.mxu0 %v239
        %588 = vmatprep.subr.mxu0 0.0
        %589 = vmatpush1.msra.mxu0 %v240
        %590 = vmatprep.subr.mxu0 0.0
        %591 = vmatpush1.msra.mxu0 %v241
        %592 = vmatprep.subr.mxu0 0.0
        %593 = vmatpush1.msra.mxu0 %v242
        %594 = vmatprep.subr.mxu0 0.0
        %595 = vmatpush1.msra.mxu0 %v243
        %596 = vmatprep.subr.mxu0 0.0
        %597 = vmatpush1.msra.mxu0 %v244
        %598 = vmatprep.subr.mxu0 0.0
        %599 = vmatpush1.msra.mxu0 %v245
        %600 = vmatprep.subr.mxu0 0.0
        %601 = vmatpush1.msra.mxu0 %v246
        %602 = vmatprep.subr.mxu0 0.0
        %603 = vmatpush1.msra.mxu0 %v247
        %604 = vmatprep.subr.mxu0 0.0
        %605 = vmatpush1.msra.mxu0 %v248
        %606 = vmatprep.subr.mxu0 0.0
        %607 = vmatpush1.msra.mxu0 %v249
        %608 = vmatprep.subr.mxu0 0.0
        %609 = vmatpush1.msra.mxu0 %v250
        %610 = vmatprep.subr.mxu0 0.0
        %611 = vmatpush1.msra.mxu0 %v251
        %612 = vmatprep.subr.mxu0 0.0
        %613 = vmatpush1.msra.mxu0 %v252
        %614 = vmatprep.subr.mxu0 0.0
        %615 = vmatpush1.msra.mxu0 %v253
        %616 = vmatprep.subr.mxu0 0.0
        %617 = vmatpush1.msra.mxu0 %v254
        %618 = vmatprep.subr.mxu0 0.0
        %619 = vmatpush1.msra.mxu0 %v255
        %620 = vmatprep.subr.mxu0 0.0
        %621 = vmatpush1.msra.mxu0 %v256
        %622 = vmatprep.subr.mxu0 0.0
        %623 = vmatpush1.msra.mxu0 %v257
        %624 = vmatprep.subr.mxu0 0.0
        %625 = vmatpush1.msra.mxu0 %v258
        %626 = vmatprep.subr.mxu0 0.0
        %627 = vmatpush1.msra.mxu0 %v259
        %628 = vmatprep.subr.mxu0 0.0
        %629 = vmatpush1.msra.mxu0 %v260
        %630 = vmatprep.subr.mxu0 0.0
        %631 = vmatpush1.msra.mxu0 %v261
        %632 = vmatprep.subr.mxu0 0.0
        %633 = vmatpush1.msra.mxu0 %v262
        %634 = vmatprep.subr.mxu0 0.0
        %635 = vmatpush1.msra.mxu0 %v263
        %636 = vmatprep.subr.mxu0 0.0
        %637 = vmatpush1.msra.mxu0 %v264
        %638 = vmatprep.subr.mxu0 0.0
        %639 = vmatpush1.msra.mxu0 %v265
        %640 = vmatprep.subr.mxu0 0.0
        %641 = vmatpush1.msra.mxu0 %v266
        %642 = vmatprep.mubr.f32.mxu0 %v215
        %643 = vmatmul.mubr.f32.gmra.mrb[0].mxu0 %v214
        %v644 = vpop.f32.mrb[0].mxu0
        %v645 = vadd.f32 %v576, %v644
        %v646 = vpop.f32.mrb[0].mxu0
        %647 = vdwg.mxu0
        %648 = vmatprep.subr.mxu0 0.0
        %649 = vmatpush1.msra.mxu0 %v267
        %650 = vmatprep.subr.mxu0 0.0
        %651 = vmatpush1.msra.mxu0 %v268
        %652 = vmatprep.subr.mxu0 0.0
        %653 = vmatpush1.msra.mxu0 %v269
        %654 = vmatprep.subr.mxu0 0.0
        %655 = vmatpush1.msra.mxu0 %v270
        %656 = vmatprep.subr.mxu0 0.0
        %657 = vmatpush1.msra.mxu0 %v271
        %658 = vmatprep.subr.mxu0 0.0
        %659 = vmatpush1.msra.mxu0 %v272
        %660 = vmatprep.subr.mxu0 0.0
        %661 = vmatpush1.msra.mxu0 %v273
        %662 = vmatprep.subr.mxu0 0.0
        %663 = vmatpush1.msra.mxu0 %v274
        %664 = vmatprep.subr.mxu0 0.0
        %665 = vmatpush1.msra.mxu0 %v275
        %666 = vmatprep.subr.mxu0 0.0
        %667 = vmatpush1.msra.mxu0 %v276
        %668 = vmatprep.subr.mxu0 0.0
        %669 = vmatpush1.msra.mxu0 %v277
        %670 = vmatprep.subr.mxu0 0.0
        %671 = vmatpush1.msra.mxu0 %v278
        %672 = vmatprep.subr.mxu0 0.0
        %673 = vmatpush1.msra.mxu0 %v279
        %674 = vmatprep.subr.mxu0 0.0
        %675 = vmatpush1.msra.mxu0 %v280
        %676 = vmatprep.subr.mxu0 0.0
        %677 = vmatpush1.msra.mxu0 %v281
        %678 = vmatprep.subr.mxu0 0.0
        %679 = vmatpush1.msra.mxu0 %v282
        %680 = vmatprep.subr.mxu0 0.0
        %681 = vmatpush1.msra.mxu0 %v283
        %682 = vmatprep.subr.mxu0 0.0
        %683 = vmatpush1.msra.mxu0 %v284
        %684 = vmatprep.subr.mxu0 0.0
        %685 = vmatpush1.msra.mxu0 %v285
        %686 = vmatprep.subr.mxu0 0.0
        %687 = vmatpush1.msra.mxu0 %v286
        %688 = vmatprep.subr.mxu0 0.0
        %689 = vmatpush1.msra.mxu0 %v287
        %690 = vmatprep.subr.mxu0 0.0
        %691 = vmatpush1.msra.mxu0 %v288
        %692 = vmatprep.subr.mxu0 0.0
        %693 = vmatpush1.msra.mxu0 %v289
        %694 = vmatprep.subr.mxu0 0.0
        %695 = vmatpush1.msra.mxu0 %v290
        %696 = vmatprep.subr.mxu0 0.0
        %697 = vmatpush1.msra.mxu0 %v291
        %698 = vmatprep.subr.mxu0 0.0
        %699 = vmatpush1.msra.mxu0 %v292
        %700 = vmatprep.subr.mxu0 0.0
        %701 = vmatpush1.msra.mxu0 %v293
        %702 = vmatprep.subr.mxu0 0.0
        %703 = vmatpush1.msra.mxu0 %v294
        %704 = vmatprep.subr.mxu0 0.0
        %705 = vmatpush1.msra.mxu0 %v295
        %706 = vmatprep.subr.mxu0 0.0
        %707 = vmatpush1.msra.mxu0 %v296
        %708 = vmatprep.subr.mxu0 0.0
        %709 = vmatpush1.msra.mxu0 %v297
        %710 = vmatprep.subr.mxu0 0.0
        %711 = vmatpush1.msra.mxu0 %v298
        %712 = vmatprep.mubr.f32.mxu0 %v217
        %713 = vmatmul.mubr.f32.gmra.mrb[0].mxu0 %v216
        %v714 = vpop.f32.mrb[0].mxu0
        %v715 = vadd.f32 %v645, %v714
        %v716 = vpop.f32.mrb[0].mxu0
        %717 = vdwg.mxu0
        %718 = vmatprep.subr.mxu0 0.0
        %719 = vmatpush1.msra.mxu0 %v299
        %720 = vmatprep.subr.mxu0 0.0
        %721 = vmatpush1.msra.mxu0 %v300
        %722 = vmatprep.subr.mxu0 0.0
        %723 = vmatpush1.msra.mxu0 %v301
        %724 = vmatprep.subr.mxu0 0.0
        %725 = vmatpush1.msra.mxu0 %v302
        %726 = vmatprep.subr.mxu0 0.0
        %727 = vmatpush1.msra.mxu0 %v303
        %728 = vmatprep.subr.mxu0 0.0
        %729 = vmatpush1.msra.mxu0 %v304
        %730 = vmatprep.subr.mxu0 0.0
        %731 = vmatpush1.msra.mxu0 %v305
        %732 = vmatprep.subr.mxu0 0.0
        %733 = vmatpush1.msra.mxu0 %v306
        %734 = vmatprep.subr.mxu0 0.0
        %735 = vmatpush1.msra.mxu0 %v307
        %736 = vmatprep.subr.mxu0 0.0
        %737 = vmatpush1.msra.mxu0 %v308
        %738 = vmatprep.subr.mxu0 0.0
        %739 = vmatpush1.msra.mxu0 %v309
        %740 = vmatprep.subr.mxu0 0.0
        %741 = vmatpush1.msra.mxu0 %v310
        %742 = vmatprep.subr.mxu0 0.0
        %743 = vmatpush1.msra.mxu0 %v311
        %744 = vmatprep.subr.mxu0 0.0
        %745 = vmatpush1.msra.mxu0 %v312
        %746 = vmatprep.subr.mxu0 0.0
        %747 = vmatpush1.msra.mxu0 %v313
        %748 = vmatprep.subr.mxu0 0.0
        %749 = vmatpush1.msra.mxu0 %v314
        %750 = vmatprep.subr.mxu0 0.0
        %751 = vmatpush1.msra.mxu0 %v315
        %752 = vmatprep.subr.mxu0 0.0
        %753 = vmatpush1.msra.mxu0 %v316
        %754 = vmatprep.subr.mxu0 0.0
        %755 = vmatpush1.msra.mxu0 %v317
        %756 = vmatprep.subr.mxu0 0.0
        %757 = vmatpush1.msra.mxu0 %v318
        %758 = vmatprep.subr.mxu0 0.0
        %759 = vmatpush1.msra.mxu0 %v319
        %760 = vmatprep.subr.mxu0 0.0
        %761 = vmatpush1.msra.mxu0 %v320
        %762 = vmatprep.subr.mxu0 0.0
        %763 = vmatpush1.msra.mxu0 %v321
        %764 = vmatprep.subr.mxu0 0.0
        %765 = vmatpush1.msra.mxu0 %v322
        %766 = vmatprep.subr.mxu0 0.0
        %767 = vmatpush1.msra.mxu0 %v323
        %768 = vmatprep.subr.mxu0 0.0
        %769 = vmatpush1.msra.mxu0 %v324
        %770 = vmatprep.subr.mxu0 0.0
        %771 = vmatpush1.msra.mxu0 %v325
        %772 = vmatprep.subr.mxu0 0.0
        %773 = vmatpush1.msra.mxu0 %v326
        %774 = vmatprep.subr.mxu0 0.0
        %775 = vmatpush1.msra.mxu0 %v327
        %776 = vmatprep.subr.mxu0 0.0
        %777 = vmatpush1.msra.mxu0 %v328
        %778 = vmatprep.subr.mxu0 0.0
        %779 = vmatpush1.msra.mxu0 %v329
        %780 = vmatprep.subr.mxu0 0.0
        %781 = vmatpush1.msra.mxu0 %v330
        %782 = vmatprep.mubr.f32.mxu0 %v219
        %783 = vmatmul.mubr.f32.gmra.mrb[0].mxu0 %v218
        %v784 = vpop.f32.mrb[0].mxu0
        %v785 = vadd.f32 %v715, %v784
        %v786 = vpop.f32.mrb[0].mxu0
        %787 = vdwg.mxu0
        %788 = vmatprep.subr.mxu0 0.0
        %789 = vmatpush1.msra.mxu0 %v331
        %790 = vmatprep.subr.mxu0 0.0
        %791 = vmatpush1.msra.mxu0 %v332
        %792 = vmatprep.subr.mxu0 0.0
        %793 = vmatpush1.msra.mxu0 %v333
        %794 = vmatprep.subr.mxu0 0.0
        %795 = vmatpush1.msra.mxu0 %v334
        %796 = vmatprep.subr.mxu0 0.0
        %797 = vmatpush1.msra.mxu0 %v335
        %798 = vmatprep.subr.mxu0 0.0
        %799 = vmatpush1.msra.mxu0 %v336
        %800 = vmatprep.subr.mxu0 0.0
        %801 = vmatpush1.msra.mxu0 %v337
        %802 = vmatprep.subr.mxu0 0.0
        %803 = vmatpush1.msra.mxu0 %v338
        %804 = vmatprep.subr.mxu0 0.0
        %805 = vmatpush1.msra.mxu0 %v339
        %806 = vmatprep.subr.mxu0 0.0
        %807 = vmatpush1.msra.mxu0 %v340
        %808 = vmatprep.subr.mxu0 0.0
        %809 = vmatpush1.msra.mxu0 %v341
        %810 = vmatprep.subr.mxu0 0.0
        %811 = vmatpush1.msra.mxu0 %v342
        %812 = vmatprep.subr.mxu0 0.0
        %813 = vmatpush1.msra.mxu0 %v343
        %814 = vmatprep.subr.mxu0 0.0
        %815 = vmatpush1.msra.mxu0 %v344
        %816 = vmatprep.subr.mxu0 0.0
        %817 = vmatpush1.msra.mxu0 %v345
        %818 = vmatprep.subr.mxu0 0.0
        %819 = vmatpush1.msra.mxu0 %v346
        %820 = vmatprep.subr.mxu0 0.0
        %821 = vmatpush1.msra.mxu0 %v347
        %822 = vmatprep.subr.mxu0 0.0
        %823 = vmatpush1.msra.mxu0 %v348
        %824 = vmatprep.subr.mxu0 0.0
        %825 = vmatpush1.msra.mxu0 %v349
        %826 = vmatprep.subr.mxu0 0.0
        %827 = vmatpush1.msra.mxu0 %v350
        %828 = vmatprep.subr.mxu0 0.0
        %829 = vmatpush1.msra.mxu0 %v351
        %830 = vmatprep.subr.mxu0 0.0
        %831 = vmatpush1.msra.mxu0 %v352
        %832 = vmatprep.subr.mxu0 0.0
        %833 = vmatpush1.msra.mxu0 %v353
        %834 = vmatprep.subr.mxu0 0.0
        %835 = vmatpush1.msra.mxu0 %v354
        %836 = vmatprep.subr.mxu0 0.0
        %837 = vmatpush1.msra.mxu0 %v355
        %838 = vmatprep.subr.mxu0 0.0
        %839 = vmatpush1.msra.mxu0 %v356
        %840 = vmatprep.subr.mxu0 0.0
        %841 = vmatpush1.msra.mxu0 %v357
        %842 = vmatprep.subr.mxu0 0.0
        %843 = vmatpush1.msra.mxu0 %v358
        %844 = vmatprep.subr.mxu0 0.0
        %845 = vmatpush1.msra.mxu0 %v359
        %846 = vmatprep.subr.mxu0 0.0
        %847 = vmatpush1.msra.mxu0 %v360
        %848 = vmatprep.subr.mxu0 0.0
        %849 = vmatpush1.msra.mxu0 %v361
        %850 = vmatprep.subr.mxu0 0.0
        %851 = vmatpush1.msra.mxu0 %v362
        %852 = vmatprep.mubr.f32.mxu0 %v221
        %853 = vmatmul.mubr.f32.gmra.mrb[0].mxu0 %v220
        %v854 = vpop.f32.mrb[0].mxu0
        %v855 = vadd.f32 %v785, %v854
        %v856 = vpop.f32.mrb[0].mxu0
        %857 = vdwg.mxu0
        %858 = vmatprep.subr.mxu0 0.0
        %859 = vmatpush1.msra.mxu0 %v363
        %860 = vmatprep.subr.mxu0 0.0
        %861 = vmatpush1.msra.mxu0 %v364
        %862 = vmatprep.subr.mxu0 0.0
        %863 = vmatpush1.msra.mxu0 %v365
        %864 = vmatprep.subr.mxu0 0.0
        %865 = vmatpush1.msra.mxu0 %v366
        %866 = vmatprep.subr.mxu0 0.0
        %867 = vmatpush1.msra.mxu0 %v367
        %868 = vmatprep.subr.mxu0 0.0
        %869 = vmatpush1.msra.mxu0 %v368
        %870 = vmatprep.subr.mxu0 0.0
        %871 = vmatpush1.msra.mxu0 %v369
        %872 = vmatprep.subr.mxu0 0.0
        %873 = vmatpush1.msra.mxu0 %v370
        %874 = vmatprep.subr.mxu0 0.0
        %875 = vmatpush1.msra.mxu0 %v371
        %876 = vmatprep.subr.mxu0 0.0
        %877 = vmatpush1.msra.mxu0 %v372
        %878 = vmatprep.subr.mxu0 0.0
        %879 = vmatpush1.msra.mxu0 %v373
        %880 = vmatprep.subr.mxu0 0.0
        %881 = vmatpush1.msra.mxu0 %v374
        %882 = vmatprep.subr.mxu0 0.0
        %883 = vmatpush1.msra.mxu0 %v375
        %884 = vmatprep.subr.mxu0 0.0
        %885 = vmatpush1.msra.mxu0 %v376
        %886 = vmatprep.subr.mxu0 0.0
        %887 = vmatpush1.msra.mxu0 %v377
        %888 = vmatprep.subr.mxu0 0.0
        %889 = vmatpush1.msra.mxu0 %v378
        %890 = vmatprep.subr.mxu0 0.0
        %891 = vmatpush1.msra.mxu0 %v379
        %892 = vmatprep.subr.mxu0 0.0
        %893 = vmatpush1.msra.mxu0 %v380
        %894 = vmatprep.subr.mxu0 0.0
        %895 = vmatpush1.msra.mxu0 %v381
        %896 = vmatprep.subr.mxu0 0.0
        %897 = vmatpush1.msra.mxu0 %v382
        %898 = vmatprep.subr.mxu0 0.0
        %899 = vmatpush1.msra.mxu0 %v383
        %900 = vmatprep.subr.mxu0 0.0
        %901 = vmatpush1.msra.mxu0 %v384
        %902 = vmatprep.subr.mxu0 0.0
        %903 = vmatpush1.msra.mxu0 %v385
        %904 = vmatprep.subr.mxu0 0.0
        %905 = vmatpush1.msra.mxu0 %v386
        %906 = vmatprep.subr.mxu0 0.0
        %907 = vmatpush1.msra.mxu0 %v387
        %908 = vmatprep.subr.mxu0 0.0
        %909 = vmatpush1.msra.mxu0 %v388
        %910 = vmatprep.subr.mxu0 0.0
        %911 = vmatpush1.msra.mxu0 %v389
        %912 = vmatprep.subr.mxu0 0.0
        %913 = vmatpush1.msra.mxu0 %v390
        %914 = vmatprep.subr.mxu0 0.0
        %915 = vmatpush1.msra.mxu0 %v391
        %916 = vmatprep.subr.mxu0 0.0
        %917 = vmatpush1.msra.mxu0 %v392
        %918 = vmatprep.subr.mxu0 0.0
        %919 = vmatpush1.msra.mxu0 %v393
        %920 = vmatprep.subr.mxu0 0.0
        %921 = vmatpush1.msra.mxu0 %v394
        %922 = vmatprep.mubr.f32.mxu0 %v223
        %923 = vmatmul.mubr.f32.gmra.mrb[0].mxu0 %v222
        %v924 = vpop.f32.mrb[0].mxu0
        %v925 = vadd.f32 %v855, %v924
        %v926 = vpop.f32.mrb[0].mxu0
        %927 = vdwg.mxu0
        %928 = vmatprep.subr.mxu0 0.0
        %929 = vmatpush1.msra.mxu0 %v395
        %930 = vmatprep.subr.mxu0 0.0
        %931 = vmatpush1.msra.mxu0 %v396
        %932 = vmatprep.subr.mxu0 0.0
        %933 = vmatpush1.msra.mxu0 %v397
        %934 = vmatprep.subr.mxu0 0.0
        %935 = vmatpush1.msra.mxu0 %v398
        %936 = vmatprep.subr.mxu0 0.0
        %937 = vmatpush1.msra.mxu0 %v399
        %938 = vmatprep.subr.mxu0 0.0
        %939 = vmatpush1.msra.mxu0 %v400
        %940 = vmatprep.subr.mxu0 0.0
        %941 = vmatpush1.msra.mxu0 %v401
        %942 = vmatprep.subr.mxu0 0.0
        %943 = vmatpush1.msra.mxu0 %v402
        %944 = vmatprep.subr.mxu0 0.0
        %945 = vmatpush1.msra.mxu0 %v403
        %946 = vmatprep.subr.mxu0 0.0
        %947 = vmatpush1.msra.mxu0 %v404
        %948 = vmatprep.subr.mxu0 0.0
        %949 = vmatpush1.msra.mxu0 %v405
        %950 = vmatprep.subr.mxu0 0.0
        %951 = vmatpush1.msra.mxu0 %v406
        %952 = vmatprep.subr.mxu0 0.0
        %953 = vmatpush1.msra.mxu0 %v407
        %954 = vmatprep.subr.mxu0 0.0
        %955 = vmatpush1.msra.mxu0 %v408
        %956 = vmatprep.subr.mxu0 0.0
        %957 = vmatpush1.msra.mxu0 %v409
        %958 = vmatprep.subr.mxu0 0.0
        %959 = vmatpush1.msra.mxu0 %v410
        %960 = vmatprep.subr.mxu0 0.0
        %961 = vmatpush1.msra.mxu0 %v411
        %962 = vmatprep.subr.mxu0 0.0
        %963 = vmatpush1.msra.mxu0 %v412
        %964 = vmatprep.subr.mxu0 0.0
        %965 = vmatpush1.msra.mxu0 %v413
        %966 = vmatprep.subr.mxu0 0.0
        %967 = vmatpush1.msra.mxu0 %v414
        %968 = vmatprep.subr.mxu0 0.0
        %969 = vmatpush1.msra.mxu0 %v415
        %970 = vmatprep.subr.mxu0 0.0
        %971 = vmatpush1.msra.mxu0 %v416
        %972 = vmatprep.subr.mxu0 0.0
        %973 = vmatpush1.msra.mxu0 %v417
        %974 = vmatprep.subr.mxu0 0.0
        %975 = vmatpush1.msra.mxu0 %v418
        %976 = vmatprep.subr.mxu0 0.0
        %977 = vmatpush1.msra.mxu0 %v419
        %978 = vmatprep.subr.mxu0 0.0
        %979 = vmatpush1.msra.mxu0 %v420
        %980 = vmatprep.subr.mxu0 0.0
        %981 = vmatpush1.msra.mxu0 %v421
        %982 = vmatprep.subr.mxu0 0.0
        %983 = vmatpush1.msra.mxu0 %v422
        %984 = vmatprep.subr.mxu0 0.0
        %985 = vmatpush1.msra.mxu0 %v423
        %986 = vmatprep.subr.mxu0 0.0
        %987 = vmatpush1.msra.mxu0 %v424
        %988 = vmatprep.subr.mxu0 0.0
        %989 = vmatpush1.msra.mxu0 %v425
        %990 = vmatprep.subr.mxu0 0.0
        %991 = vmatpush1.msra.mxu0 %v426
        %992 = vmatprep.mubr.f32.mxu0 %v225
        %993 = vmatmul.mubr.f32.gmra.mrb[0].mxu0 %v224
        %v994 = vpop.f32.mrb[0].mxu0
        %v995 = vadd.f32 %v925, %v994
        %v996 = vpop.f32.mrb[0].mxu0
        %997 = vdwg.mxu0
        %998 = vmatprep.subr.mxu0 0.0
        %999 = vmatpush1.msra.mxu0 %v427
        %1000 = vmatprep.subr.mxu0 0.0
        %1001 = vmatpush1.msra.mxu0 %v428
        %1002 = vmatprep.subr.mxu0 0.0
        %1003 = vmatpush1.msra.mxu0 %v429
        %1004 = vmatprep.subr.mxu0 0.0
        %1005 = vmatpush1.msra.mxu0 %v430
        %1006 = vmatprep.subr.mxu0 0.0
        %1007 = vmatpush1.msra.mxu0 %v431
        %1008 = vmatprep.subr.mxu0 0.0
        %1009 = vmatpush1.msra.mxu0 %v432
        %1010 = vmatprep.subr.mxu0 0.0
        %1011 = vmatpush1.msra.mxu0 %v433
        %1012 = vmatprep.subr.mxu0 0.0
        %1013 = vmatpush1.msra.mxu0 %v434
        %1014 = vmatprep.subr.mxu0 0.0
        %1015 = vmatpush1.msra.mxu0 %v435
        %1016 = vmatprep.subr.mxu0 0.0
        %1017 = vmatpush1.msra.mxu0 %v436
        %1018 = vmatprep.subr.mxu0 0.0
        %1019 = vmatpush1.msra.mxu0 %v437
        %1020 = vmatprep.subr.mxu0 0.0
        %1021 = vmatpush1.msra.mxu0 %v438
        %1022 = vmatprep.subr.mxu0 0.0
        %1023 = vmatpush1.msra.mxu0 %v439
        %1024 = vmatprep.subr.mxu0 0.0
        %1025 = vmatpush1.msra.mxu0 %v440
        %1026 = vmatprep.subr.mxu0 0.0
        %1027 = vmatpush1.msra.mxu0 %v441
        %1028 = vmatprep.subr.mxu0 0.0
        %1029 = vmatpush1.msra.mxu0 %v442
        %1030 = vmatprep.subr.mxu0 0.0
        %1031 = vmatpush1.msra.mxu0 %v443
        %1032 = vmatprep.subr.mxu0 0.0
        %1033 = vmatpush1.msra.mxu0 %v444
        %1034 = vmatprep.subr.mxu0 0.0
        %1035 = vmatpush1.msra.mxu0 %v445
        %1036 = vmatprep.subr.mxu0 0.0
        %1037 = vmatpush1.msra.mxu0 %v446
        %1038 = vmatprep.subr.mxu0 0.0
        %1039 = vmatpush1.msra.mxu0 %v447
        %1040 = vmatprep.subr.mxu0 0.0
        %1041 = vmatpush1.msra.mxu0 %v448
        %1042 = vmatprep.subr.mxu0 0.0
        %1043 = vmatpush1.msra.mxu0 %v449
        %1044 = vmatprep.subr.mxu0 0.0
        %1045 = vmatpush1.msra.mxu0 %v450
        %1046 = vmatprep.subr.mxu0 0.0
        %1047 = vmatpush1.msra.mxu0 %v451
        %1048 = vmatprep.subr.mxu0 0.0
        %1049 = vmatpush1.msra.mxu0 %v452
        %1050 = vmatprep.subr.mxu0 0.0
        %1051 = vmatpush1.msra.mxu0 %v453
        %1052 = vmatprep.subr.mxu0 0.0
        %1053 = vmatpush1.msra.mxu0 %v454
        %1054 = vmatprep.subr.mxu0 0.0
        %1055 = vmatpush1.msra.mxu0 %v455
        %1056 = vmatprep.subr.mxu0 0.0
        %1057 = vmatpush1.msra.mxu0 %v456
        %1058 = vmatprep.subr.mxu0 0.0
        %1059 = vmatpush1.msra.mxu0 %v457
        %1060 = vmatprep.subr.mxu0 0.0
        %1061 = vmatpush1.msra.mxu0 %v458
        %1062 = vmatprep.mubr.f32.mxu0 %v227
        %1063 = vmatmul.mubr.f32.gmra.mrb[0].mxu0 %v226
        %v1064 = vpop.f32.mrb[0].mxu0
        %v1065 = vadd.f32 %v995, %v1064
        %v1066 = vpop.f32.mrb[0].mxu0
        %1067 = vdwg.mxu0
        %1068 = vmatprep.subr.mxu0 0.0
        %1069 = vmatpush1.msra.mxu0 %v459
        %1070 = vmatprep.subr.mxu0 0.0
        %1071 = vmatpush1.msra.mxu0 %v460
        %1072 = vmatprep.subr.mxu0 0.0
        %1073 = vmatpush1.msra.mxu0 %v461
        %1074 = vmatprep.subr.mxu0 0.0
        %1075 = vmatpush1.msra.mxu0 %v462
        %1076 = vmatprep.subr.mxu0 0.0
        %1077 = vmatpush1.msra.mxu0 %v463
        %1078 = vmatprep.subr.mxu0 0.0
        %1079 = vmatpush1.msra.mxu0 %v464
        %1080 = vmatprep.subr.mxu0 0.0
        %1081 = vmatpush1.msra.mxu0 %v465
        %1082 = vmatprep.subr.mxu0 0.0
        %1083 = vmatpush1.msra.mxu0 %v466
        %1084 = vmatprep.subr.mxu0 0.0
        %1085 = vmatpush1.msra.mxu0 %v467
        %1086 = vmatprep.subr.mxu0 0.0
        %1087 = vmatpush1.msra.mxu0 %v468
        %1088 = vmatprep.subr.mxu0 0.0
        %1089 = vmatpush1.msra.mxu0 %v469
        %1090 = vmatprep.subr.mxu0 0.0
        %1091 = vmatpush1.msra.mxu0 %v470
        %1092 = vmatprep.subr.mxu0 0.0
        %1093 = vmatpush1.msra.mxu0 %v471
        %1094 = vmatprep.subr.mxu0 0.0
        %1095 = vmatpush1.msra.mxu0 %v472
        %1096 = vmatprep.subr.mxu0 0.0
        %1097 = vmatpush1.msra.mxu0 %v473
        %1098 = vmatprep.subr.mxu0 0.0
        %1099 = vmatpush1.msra.mxu0 %v474
        %1100 = vmatprep.subr.mxu0 0.0
        %1101 = vmatpush1.msra.mxu0 %v475
        %1102 = vmatprep.subr.mxu0 0.0
        %1103 = vmatpush1.msra.mxu0 %v476
        %1104 = vmatprep.subr.mxu0 0.0
        %1105 = vmatpush1.msra.mxu0 %v477
        %1106 = vmatprep.subr.mxu0 0.0
        %1107 = vmatpush1.msra.mxu0 %v478
        %1108 = vmatprep.subr.mxu0 0.0
        %1109 = vmatpush1.msra.mxu0 %v479
        %1110 = vmatprep.subr.mxu0 0.0
        %1111 = vmatpush1.msra.mxu0 %v480
        %1112 = vmatprep.subr.mxu0 0.0
        %1113 = vmatpush1.msra.mxu0 %v481
        %1114 = vmatprep.subr.mxu0 0.0
        %1115 = vmatpush1.msra.mxu0 %v482
        %1116 = vmatprep.subr.mxu0 0.0
        %1117 = vmatpush1.msra.mxu0 %v483
        %1118 = vmatprep.subr.mxu0 0.0
        %1119 = vmatpush1.msra.mxu0 %v484
        %1120 = vmatprep.subr.mxu0 0.0
        %1121 = vmatpush1.msra.mxu0 %v485
        %1122 = vmatprep.subr.mxu0 0.0
        %1123 = vmatpush1.msra.mxu0 %v486
        %1124 = vmatprep.subr.mxu0 0.0
        %1125 = vmatpush1.msra.mxu0 %v487
        %1126 = vmatprep.subr.mxu0 0.0
        %1127 = vmatpush1.msra.mxu0 %v488
        %1128 = vmatprep.subr.mxu0 0.0
        %1129 = vmatpush1.msra.mxu0 %v489
        %1130 = vmatprep.subr.mxu0 0.0
        %1131 = vmatpush1.msra.mxu0 %v490
        %1132 = vmatprep.mubr.f32.mxu0 %v229
        %1133 = vmatmul.mubr.f32.gmra.mrb[0].mxu0 %v228
        %v1134 = vpop.f32.mrb[0].mxu0
        %v1135 = vadd.f32 %v1065, %v1134
        %v1136 = vpop.f32.mrb[0].mxu0
        %1137 = vdwg.mxu0
        %1138 = vmatprep.subr.mxu0 0.0
        %1139 = vmatpush1.msra.mxu0 %v491
        %1140 = vmatprep.subr.mxu0 0.0
        %1141 = vmatpush1.msra.mxu0 %v492
        %1142 = vmatprep.subr.mxu0 0.0
        %1143 = vmatpush1.msra.mxu0 %v493
        %1144 = vmatprep.subr.mxu0 0.0
        %1145 = vmatpush1.msra.mxu0 %v494
        %1146 = vmatprep.subr.mxu0 0.0
        %1147 = vmatpush1.msra.mxu0 %v495
        %1148 = vmatprep.subr.mxu0 0.0
        %1149 = vmatpush1.msra.mxu0 %v496
        %1150 = vmatprep.subr.mxu0 0.0
        %1151 = vmatpush1.msra.mxu0 %v497
        %1152 = vmatprep.subr.mxu0 0.0
        %1153 = vmatpush1.msra.mxu0 %v498
        %1154 = vmatprep.subr.mxu0 0.0
        %1155 = vmatpush1.msra.mxu0 %v499
        %1156 = vmatprep.subr.mxu0 0.0
        %1157 = vmatpush1.msra.mxu0 %v500
        %1158 = vmatprep.subr.mxu0 0.0
        %1159 = vmatpush1.msra.mxu0 %v501
        %1160 = vmatprep.subr.mxu0 0.0
        %1161 = vmatpush1.msra.mxu0 %v502
        %1162 = vmatprep.subr.mxu0 0.0
        %1163 = vmatpush1.msra.mxu0 %v503
        %1164 = vmatprep.subr.mxu0 0.0
        %1165 = vmatpush1.msra.mxu0 %v504
        %1166 = vmatprep.subr.mxu0 0.0
        %1167 = vmatpush1.msra.mxu0 %v505
        %1168 = vmatprep.subr.mxu0 0.0
        %1169 = vmatpush1.msra.mxu0 %v506
        %1170 = vmatprep.subr.mxu0 0.0
        %1171 = vmatpush1.msra.mxu0 %v507
        %1172 = vmatprep.subr.mxu0 0.0
        %1173 = vmatpush1.msra.mxu0 %v508
        %1174 = vmatprep.subr.mxu0 0.0
        %1175 = vmatpush1.msra.mxu0 %v509
        %1176 = vmatprep.subr.mxu0 0.0
        %1177 = vmatpush1.msra.mxu0 %v510
        %1178 = vmatprep.subr.mxu0 0.0
        %1179 = vmatpush1.msra.mxu0 %v511
        %1180 = vmatprep.subr.mxu0 0.0
        %1181 = vmatpush1.msra.mxu0 %v512
        %1182 = vmatprep.subr.mxu0 0.0
        %1183 = vmatpush1.msra.mxu0 %v513
        %1184 = vmatprep.subr.mxu0 0.0
        %1185 = vmatpush1.msra.mxu0 %v514
        %1186 = vmatprep.subr.mxu0 0.0
        %1187 = vmatpush1.msra.mxu0 %v515
        %1188 = vmatprep.subr.mxu0 0.0
        %1189 = vmatpush1.msra.mxu0 %v516
        %1190 = vmatprep.subr.mxu0 0.0
        %1191 = vmatpush1.msra.mxu0 %v517
        %1192 = vmatprep.subr.mxu0 0.0
        %1193 = vmatpush1.msra.mxu0 %v518
        %1194 = vmatprep.subr.mxu0 0.0
        %1195 = vmatpush1.msra.mxu0 %v519
        %1196 = vmatprep.subr.mxu0 0.0
        %1197 = vmatpush1.msra.mxu0 %v520
        %1198 = vmatprep.subr.mxu0 0.0
        %1199 = vmatpush1.msra.mxu0 %v521
        %1200 = vmatprep.subr.mxu0 0.0
        %1201 = vmatpush1.msra.mxu0 %v522
        %1202 = vmatprep.mubr.f32.mxu0 %v231
        %1203 = vmatmul.mubr.f32.gmra.mrb[0].mxu0 %v230
        %v1204 = vpop.f32.mrb[0].mxu0
        %v1205 = vadd.f32 %v1135, %v1204
        %v1206 = vpop.f32.mrb[0].mxu0
        %1207 = vdwg.mxu0
        %1208 = vmatprep.subr.mxu0 0.0
        %1209 = vmatpush1.msra.mxu0 %v523
        %1210 = vmatprep.subr.mxu0 0.0
        %1211 = vmatpush1.msra.mxu0 %v524
        %1212 = vmatprep.subr.mxu0 0.0
        %1213 = vmatpush1.msra.mxu0 %v525
        %1214 = vmatprep.subr.mxu0 0.0
        %1215 = vmatpush1.msra.mxu0 %v526
        %1216 = vmatprep.subr.mxu0 0.0
        %1217 = vmatpush1.msra.mxu0 %v527
        %1218 = vmatprep.subr.mxu0 0.0
        %1219 = vmatpush1.msra.mxu0 %v528
        %1220 = vmatprep.subr.mxu0 0.0
        %1221 = vmatpush1.msra.mxu0 %v529
        %1222 = vmatprep.subr.mxu0 0.0
        %1223 = vmatpush1.msra.mxu0 %v530
        %1224 = vmatprep.subr.mxu0 0.0
        %1225 = vmatpush1.msra.mxu0 %v531
        %1226 = vmatprep.subr.mxu0 0.0
        %1227 = vmatpush1.msra.mxu0 %v532
        %1228 = vmatprep.subr.mxu0 0.0
        %1229 = vmatpush1.msra.mxu0 %v533
        %1230 = vmatprep.subr.mxu0 0.0
        %1231 = vmatpush1.msra.mxu0 %v534
        %1232 = vmatprep.subr.mxu0 0.0
        %1233 = vmatpush1.msra.mxu0 %v535
        %1234 = vmatprep.subr.mxu0 0.0
        %1235 = vmatpush1.msra.mxu0 %v536
        %1236 = vmatprep.subr.mxu0 0.0
        %1237 = vmatpush1.msra.mxu0 %v537
        %1238 = vmatprep.subr.mxu0 0.0
        %1239 = vmatpush1.msra.mxu0 %v538
        %1240 = vmatprep.subr.mxu0 0.0
        %1241 = vmatpush1.msra.mxu0 %v539
        %1242 = vmatprep.subr.mxu0 0.0
        %1243 = vmatpush1.msra.mxu0 %v540
        %1244 = vmatprep.subr.mxu0 0.0
        %1245 = vmatpush1.msra.mxu0 %v541
        %1246 = vmatprep.subr.mxu0 0.0
        %1247 = vmatpush1.msra.mxu0 %v542
        %1248 = vmatprep.subr.mxu0 0.0
        %1249 = vmatpush1.msra.mxu0 %v543
        %1250 = vmatprep.subr.mxu0 0.0
        %1251 = vmatpush1.msra.mxu0 %v544
        %1252 = vmatprep.subr.mxu0 0.0
        %1253 = vmatpush1.msra.mxu0 %v545
        %1254 = vmatprep.subr.mxu0 0.0
        %1255 = vmatpush1.msra.mxu0 %v546
        %1256 = vmatprep.subr.mxu0 0.0
        %1257 = vmatpush1.msra.mxu0 %v547
        %1258 = vmatprep.subr.mxu0 0.0
        %1259 = vmatpush1.msra.mxu0 %v548
        %1260 = vmatprep.subr.mxu0 0.0
        %1261 = vmatpush1.msra.mxu0 %v549
        %1262 = vmatprep.subr.mxu0 0.0
        %1263 = vmatpush1.msra.mxu0 %v550
        %1264 = vmatprep.subr.mxu0 0.0
        %1265 = vmatpush1.msra.mxu0 %v551
        %1266 = vmatprep.subr.mxu0 0.0
        %1267 = vmatpush1.msra.mxu0 %v552
        %1268 = vmatprep.subr.mxu0 0.0
        %1269 = vmatpush1.msra.mxu0 %v553
        %1270 = vmatprep.subr.mxu0 0.0
        %1271 = vmatpush1.msra.mxu0 %v554
        %1272 = vmatprep.mubr.f32.mxu0 %v233
        %1273 = vmatmul.mubr.f32.gmra.mrb[0].mxu0 %v232
        %v1274 = vpop.f32.mrb[0].mxu0
        %v1275 = vadd.f32 %v1205, %v1274
        %v1276 = vpop.f32.mrb[0].mxu0
        %1277 = vdwg.mxu0
        %1278 = vmatprep.subr.mxu0 0.0
        %1279 = vmatpush1.msra.mxu0 %v555
        %1280 = vmatprep.subr.mxu0 0.0
        %1281 = vmatpush1.msra.mxu0 %v556
        %1282 = vmatprep.subr.mxu0 0.0
        %1283 = vmatpush1.msra.mxu0 %v557
        %1284 = vmatprep.subr.mxu0 0.0
        %1285 = vmatpush1.msra.mxu0 %v558
        %1286 = vmatprep.subr.mxu0 0.0
        %1287 = vmatpush1.msra.mxu0 %v559
        %1288 = vmatprep.subr.mxu0 0.0
        %1289 = vmatpush1.msra.mxu0 %v560
        %1290 = vmatprep.subr.mxu0 0.0
        %1291 = vmatpush1.msra.mxu0 %v561
        %1292 = vmatprep.subr.mxu0 0.0
        %1293 = vmatpush1.msra.mxu0 %v562
        %1294 = vmatprep.subr.mxu0 0.0
        %1295 = vmatpush1.msra.mxu0 %v563
        %1296 = vmatprep.subr.mxu0 0.0
        %1297 = vmatpush1.msra.mxu0 %v564
        %1298 = vmatprep.subr.mxu0 0.0
        %1299 = vmatpush1.msra.mxu0 %v565
        %1300 = vmatprep.subr.mxu0 0.0
        %1301 = vmatpush1.msra.mxu0 %v566
        %1302 = vmatprep.subr.mxu0 0.0
        %1303 = vmatpush1.msra.mxu0 %v567
        %1304 = vmatprep.subr.mxu0 0.0
        %1305 = vmatpush1.msra.mxu0 %v568
        %1306 = vmatprep.subr.mxu0 0.0
        %1307 = vmatpush1.msra.mxu0 %v569
        %1308 = vmatprep.subr.mxu0 0.0
        %1309 = vmatpush1.msra.mxu0 %v570
        %1310 = vmatprep.subr.mxu0 0.0
        %1311 = vmatpush1.msra.mxu0 0.0
        %1312 = vmatprep.subr.mxu0 0.0
        %1313 = vmatpush1.msra.mxu0 0.0
        %1314 = vmatprep.subr.mxu0 0.0
        %1315 = vmatpush1.msra.mxu0 0.0
        %1316 = vmatprep.subr.mxu0 0.0
        %1317 = vmatpush1.msra.mxu0 0.0
        %1318 = vmatprep.subr.mxu0 0.0
        %1319 = vmatpush1.msra.mxu0 0.0
        %1320 = vmatprep.subr.mxu0 0.0
        %1321 = vmatpush1.msra.mxu0 0.0
        %1322 = vmatprep.subr.mxu0 0.0
        %1323 = vmatpush1.msra.mxu0 0.0
        %1324 = vmatprep.subr.mxu0 0.0
        %1325 = vmatpush1.msra.mxu0 0.0
        %1326 = vmatprep.subr.mxu0 0.0
        %1327 = vmatpush1.msra.mxu0 0.0
        %1328 = vmatprep.subr.mxu0 0.0
        %1329 = vmatpush1.msra.mxu0 0.0
        %1330 = vmatprep.subr.mxu0 0.0
        %1331 = vmatpush1.msra.mxu0 0.0
        %1332 = vmatprep.subr.mxu0 0.0
        %1333 = vmatpush1.msra.mxu0 0.0
        %1334 = vmatprep.subr.mxu0 0.0
        %1335 = vmatpush1.msra.mxu0 0.0
        %1336 = vmatprep.subr.mxu0 0.0
        %1337 = vmatpush1.msra.mxu0 0.0
        %1338 = vmatprep.subr.mxu0 0.0
        %1339 = vmatpush1.msra.mxu0 0.0
        %1340 = vmatprep.subr.mxu0 0.0
        %1341 = vmatpush1.msra.mxu0 0.0
        %1342 = vmatprep.mubr.f32.mxu0 0.0
        %1343 = vmatmul.mubr.f32.gmra.mrb[0].mxu0 %v234
        %v1344 = vpop.f32.mrb[0].mxu0
        %v1345 = vadd.f32 %v1275, %v1344
        %v1346 = vpop.f32.mrb[0].mxu0
        %1347 = vdwg.mxu0
        %1348 = vst [vmem:[%s213] sm:$0xff] %v1345
        %s1349 = sand.u32 %s97, 1
        %s1350 = scalar_lea.sflag [#allocation4], %s1349
        %s1351 = sand.u32 %s97, 1
        %s1352 = smul.addr %s1351, 8
        %s1353 = scalar_lea.vmem [#allocation8], %s1352
        // Predicated region
        $region45: #{tpu_custom_call.1} parent=31 // pred_check
          %p1354 = pneg %p107
        $region46: #{tpu_custom_call.1} parent=31 // pred_check_branch
          %1356 = sbr.rel (%p1354) target = $region48
        $region47: #{tpu_custom_call.1} parent=31 // pred_region
          %s1358 = ssub.s32 128, 128
          %1359 = vsyncadd %s1350, %s1358
          %s1360 = smul.addr %s21, 128
          %s1361 = scalar_lea.hbm %s3, %s1360
          %s1363 = sshll.u32 %s1353, 4
          %s1364 = int_to_ptr.vmem [resolvable:$true] %s1363
          %1366 = dma.vmem_to_hbm [thread:$0]  %s1364, 128, %s1361, %s1350
        $region48: #{tpu_custom_call.1} parent=31 // pred_fallthru
          _
      $region32: #{tpu_custom_call.1} parent=5 // pred_fallthru
        _
      %p1367 = scmp.le.s32.totalorder 2, %s16
      // Predicated region
      $region49: #{tpu_custom_call.1} parent=5 // pred_check
        %p1368 = pneg %p1367
      $region50: #{tpu_custom_call.1} parent=5 // pred_check_branch
        %1370 = sbr.rel (%p1368) target = $region52
      $region51: #{tpu_custom_call.1} parent=5 // pred_region
        %s1371 = ssub.s32 %s16, 2
        // Predicated region
        $region53: #{tpu_custom_call.1} parent=51 // pred_check
          %p1372 = pneg %p113
        $region54: #{tpu_custom_call.1} parent=51 // pred_check_branch
          %1374 = sbr.rel (%p1372) target = $region56
        $region55: #{tpu_custom_call.1} parent=51 // pred_region
          %s1375 = sand.u32 %s98, 1
          %s1376 = scalar_lea.sflag [#allocation4], %s1375
          %s1377 = sand.u32 %s98, 1
          %s1378 = smul.addr %s1377, 8
          %s1379 = scalar_lea.vmem [#allocation8], %s1378
          %1380 = dma.done %s1376, 128
        $region56: #{tpu_custom_call.1} parent=51 // pred_fallthru
          _
      $region52: #{tpu_custom_call.1} parent=5 // pred_fallthru
        _
    $region6: #{tpu_custom_call.1} parent=1 // loop_footer
      %s20 = sadd.s32 1, %s16
    $region7: #{tpu_custom_call.1} parent=1 // loop_footer_branch
      %15 = sbr.rel target = $region3
    $region8: #{tpu_custom_call.1} parent=1 // loop_exit
      _
    %1381 = vsyncpa [#allocation3], 1
    %s1382 = scalar_lea.sflag [#allocation3], 1
    %1383 = vsyncpa %s1382, 1
    %1384 = vsyncpa [#allocation6], 1
    %1385 = vsyncpa [#allocation4], 1
    %s1386 = scalar_lea.sflag [#allocation4], 1
    %1387 = vsyncpa %s1386, 1

</llo_original>
